<compile_context>
chip_gen: v7x
topology: tpu7x:2x2x1
jax: 0.10.0
libtpu: 0.0.40
codegen_flags: <defaults>
</compile_context>

<pallas_src>
import functools

import jax
import jax.numpy as jnp
from jax.experimental import pallas as pl
from jax.experimental.pallas import tpu as pltpu


def _leaky_relu(x, slope=0.2):
    return jnp.where(x > 0, x, slope * x)


def meta_gat_kernel(x_ref, adj_ref, w1e_ref, b1_ref, w2e_ref, b2_ref, out_ref,
                    *, heads, c1, c2):
    hc1 = heads * c1
    m = pl.program_id(0)

    x = x_ref[...]                                   # [N, F]
    adj = adj_ref[...]                               # [N, N]
    # additive mask bias computed ONCE, reused by all heads and both layers
    mask_bias = jnp.where(adj > 0.5, 0.0, -1e30)     # [N, N]

    # per-meta weights live VMEM-resident across the whole grid; slice by m
    w1e = w1e_ref[m]                                 # [F, HC1 + 2H]
    b1 = b1_ref[m]                                   # [1, HC1]
    w2e = w2e_ref[m]                                 # [HC1, C2 + 2]
    b2 = b2_ref[m]                                   # [1, C2]

    # ---------- GATConv layer 1 (heads=4, 16 ch, concat) ----------
    # single fused projection: features + per-head att_src + att_dst
    z1 = jnp.dot(x, w1e, preferred_element_type=jnp.float32)   # [N, HC1+2H]
    h1 = z1[:, :hc1]                                            # [N, HC1]
    a_src = z1[:, hc1:hc1 + heads]                              # [N, H]
    a_dst = z1[:, hc1 + heads:]                                 # [N, H]

    # batched over heads: e[h, i, j] = leaky_relu(a_dst[i,h] + a_src[j,h])
    e = a_dst.T[:, :, None] + a_src.T[:, None, :]               # [H, N, N]
    e = _leaky_relu(e) + mask_bias[None]                        # masked logits
    e = e - jnp.max(e, axis=2, keepdims=True)
    p = jnp.exp(e)
    att = p / jnp.sum(p, axis=2, keepdims=True)                 # [H, N, N]

    # one batched aggregation instead of 4 separate dots
    h1h = jnp.stack([h1[:, h * c1:(h + 1) * c1] for h in range(heads)], axis=0)
    g1h = jnp.einsum('hij,hjc->hic', att, h1h,
                     preferred_element_type=jnp.float32)        # [H, N, c1]
    g1 = jnp.concatenate([g1h[h] for h in range(heads)], axis=1) + b1  # [N,HC1]

    # ELU; F.dropout(p=0.5, training=False) is identity in eval mode
    g1 = jnp.where(g1 > 0, g1, jnp.exp(g1) - 1.0)

    # ---------- GATConv layer 2 (single head, embedding_dim ch) ----------
    z2 = jnp.dot(g1, w2e, preferred_element_type=jnp.float32)   # [N, C2+2]
    h2 = z2[:, :c2]                                             # [N, C2]
    s2 = z2[:, c2:c2 + 1]                                       # [N, 1]
    d2 = z2[:, c2 + 1:]                                         # [N, 1]
    e2 = _leaky_relu(d2 + s2.T) + mask_bias                     # [N, N]
    e2 = e2 - jnp.max(e2, axis=1, keepdims=True)
    p2 = jnp.exp(e2)
    att2 = p2 / jnp.sum(p2, axis=1, keepdims=True)
    g2 = jnp.dot(att2, h2, preferred_element_type=jnp.float32) + b2  # [N, C2]

    # ---------- log_softmax over the feature dim ----------
    z = g2 - jnp.max(g2, axis=1, keepdims=True)
    lse = jnp.log(jnp.sum(jnp.exp(z), axis=1, keepdims=True))
    out_ref[...] = (z - lse).astype(out_ref.dtype)


def meta_gat_forward(x, adj, params):
    """x: [N, F]; adj: [M, N, N] (1.0 where edge j->i, self-loops included).

    Returns [M, N, embedding_dim] of log_softmax node embeddings.
    """
    w1, as1, ad1, b1 = params["w1"], params["as1"], params["ad1"], params["b1"]
    w2, as2, ad2, b2 = params["w2"], params["as2"], params["ad2"], params["b2"]
    M, N, _ = adj.shape
    F_in = x.shape[1]
    HC1 = w1.shape[-1]
    H = as1.shape[-1]
    C1 = HC1 // H
    C2 = w2.shape[-1]

    # Fold the attention projections into the feature matmuls (exact: linear).
    w1e = jnp.concatenate(
        [w1, jnp.matmul(w1, as1), jnp.matmul(w1, ad1)], axis=-1)  # [M,F,HC1+2H]
    w2e = jnp.concatenate(
        [w2, jnp.matmul(w2, as2), jnp.matmul(w2, ad2)], axis=-1)  # [M,HC1,C2+2]
    W1E = HC1 + 2 * H
    W2E = C2 + 2

    kernel = functools.partial(meta_gat_kernel, heads=H, c1=C1, c2=C2)

    grid_spec = pltpu.PrefetchScalarGridSpec(
        num_scalar_prefetch=0,
        grid=(M,),
        in_specs=[
            # shared node features: fetched once, VMEM-resident
            pl.BlockSpec((N, F_in), lambda i: (0, 0)),
            # per-meta adjacency: one [N, N] slice per grid step
            pl.BlockSpec((pl.Squeezed(), N, N), lambda i: (i, 0, 0)),
            # per-meta weights: constant index_map => DMA'd once, stay
            # VMEM-resident; the kernel indexes them by pl.program_id(0).
            pl.BlockSpec((M, F_in, W1E), lambda i: (0, 0, 0)),
            pl.BlockSpec((M, 1, HC1), lambda i: (0, 0, 0)),
            pl.BlockSpec((M, HC1, W2E), lambda i: (0, 0, 0)),
            pl.BlockSpec((M, 1, C2), lambda i: (0, 0, 0)),
        ],
        out_specs=pl.BlockSpec((pl.Squeezed(), N, C2), lambda i: (i, 0, 0)),
    )

    # NOTE(v7x scaling): if N grows past ~1-2K, tile attention over destination
    # rows and set vmem_limit_bytes explicitly (adj double-buffering + [H,N,N]
    # intermediates are the first things to blow 64 MiB VMEM). Fine at N=16.
    return pl.pallas_call(
        kernel,
        out_shape=jax.ShapeDtypeStruct((M, N, C2), jnp.float32),
        grid_spec=grid_spec,
        compiler_params=pltpu.CompilerParams(
            dimension_semantics=("parallel",)),   # M axis -> both TCs on v7x
    )(x, adj, w1e, b1, w2e, b2)


def _glorot(key, shape, fan_in, fan_out):
    lim = (6.0 / (fan_in + fan_out)) ** 0.5
    return jax.random.uniform(key, shape, jnp.float32, -lim, lim)


def init_params(key, meta_num, feature_dim, embedding_dim, heads=4, c1=16):
    ks = jax.random.split(key, 6)
    hc1 = heads * c1
    # layer-1 GATConv weights per metagraph
    w1 = _glorot(ks[0], (meta_num, feature_dim, hc1), feature_dim, hc1)
    att_src1 = _glorot(ks[1], (meta_num, heads, c1), c1, c1)
    att_dst1 = _glorot(ks[2], (meta_num, heads, c1), c1, c1)
    b1 = jnp.zeros((meta_num, 1, hc1), jnp.float32)
    # pack per-head attention vectors into block-diagonal matmul operands:
    # as1[m, h*c1 + c, h] = att_src1[m, h, c]   (so h1 @ as1 -> per-head sums)
    row_idx = jnp.arange(hc1)
    head_idx = jnp.repeat(jnp.arange(heads), c1)
    as1 = jnp.zeros((meta_num, hc1, heads), jnp.float32)
    ad1 = jnp.zeros((meta_num, hc1, heads), jnp.float32)
    as1 = as1.at[:, row_idx, head_idx].set(att_src1.reshape(meta_num, hc1))
    ad1 = ad1.at[:, row_idx, head_idx].set(att_dst1.reshape(meta_num, hc1))
    # layer-2 GATConv (single head)
    w2 = _glorot(ks[3], (meta_num, hc1, embedding_dim), hc1, embedding_dim)
    as2 = _glorot(ks[4], (meta_num, embedding_dim, 1),
                  embedding_dim, embedding_dim)
    ad2 = _glorot(ks[5], (meta_num, embedding_dim, 1),
                  embedding_dim, embedding_dim)
    b2 = jnp.zeros((meta_num, 1, embedding_dim), jnp.float32)
    return dict(w1=w1, as1=as1, ad1=ad1, b1=b1,
                w2=w2, as2=as2, ad2=ad2, b2=b2)


if __name__ == "__main__":
    meta_num = 2          # number of metagraphs (len(all_neighbours))
    num_nodes = 16        # graph nodes
    feature_dim = 8
    embedding_dim = 32

    key = jax.random.PRNGKey(0)
    k_x, k_adj, k_p = jax.random.split(key, 3)

    # feature_embedding: [N, feature_dim]
    x = jax.random.normal(k_x, (num_nodes, feature_dim), jnp.float32)

    # all_neighbours -> dense per-meta adjacency masks with self-loops.
    rand = jax.random.uniform(k_adj, (meta_num, num_nodes, num_nodes))
    adj = (rand < 0.3).astype(jnp.float32)
    eye = jnp.eye(num_nodes, dtype=jnp.float32)[None]
    adj = jnp.clip(adj + eye, 0.0, 1.0)      # ensure self-loop on every node

    params = init_params(k_p, meta_num, feature_dim, embedding_dim)

    out = meta_gat_forward(x, adj, params)   # [meta_num, N, embedding_dim]
    out = jax.block_until_ready(out)

    assert out.shape == (meta_num, num_nodes, embedding_dim)
    assert bool(jnp.all(jnp.isfinite(out)))
    # rows of log_softmax should exp-sum to 1
    assert bool(jnp.allclose(jnp.sum(jnp.exp(out), axis=-1), 1.0, atol=1e-4))
    print("KERNEL_OK")
</pallas_src>

<mosaic_0001>
module attributes {stable_mosaic.version = 11 : i64} {
  func.func @meta_gat_kernel(%arg0: i32, %arg1: memref<16x8xf32, #tpu.memory_space<vmem>>, %arg2: memref<1x16x16xf32, #tpu.memory_space<vmem>>, %arg3: memref<2x8x72xf32, #tpu.memory_space<vmem>>, %arg4: memref<2x1x64xf32, #tpu.memory_space<vmem>>, %arg5: memref<2x64x34xf32, #tpu.memory_space<vmem>>, %arg6: memref<2x1x32xf32, #tpu.memory_space<vmem>>, %arg7: memref<1x16x32xf32, #tpu.memory_space<vmem>>) attributes {dimension_semantics = [#tpu.dimension_semantics<parallel>], iteration_bounds = array<i64: 2>, scalar_prefetch = 0 : i64, scratch_operands = 0 : i64, tpu.core_type = #tpu.core_type<tc>, window_params = [{pipeline_mode = #tpu.pipeline_mode<synchronous>, transform_indices = @transform_0, window_bounds = array<i64: 16, 8>}, {transform_indices = @transform_1, window_bounds = array<i64: 1, 16, 16>}, {pipeline_mode = #tpu.pipeline_mode<synchronous>, transform_indices = @transform_2, window_bounds = array<i64: 2, 8, 72>}, {pipeline_mode = #tpu.pipeline_mode<synchronous>, transform_indices = @transform_3, window_bounds = array<i64: 2, 1, 64>}, {pipeline_mode = #tpu.pipeline_mode<synchronous>, transform_indices = @transform_4, window_bounds = array<i64: 2, 64, 34>}, {pipeline_mode = #tpu.pipeline_mode<synchronous>, transform_indices = @transform_5, window_bounds = array<i64: 2, 1, 32>}, {transform_indices = @transform_6, window_bounds = array<i64: 1, 16, 32>}]} {
    %c0 = arith.constant 0 : index
    %c0_0 = arith.constant 0 : index
    %0 = vector.load %arg1[%c0, %c0_0] : memref<16x8xf32, #tpu.memory_space<vmem>>, vector<16x8xf32>
    %c0_1 = arith.constant 0 : index
    %c0_2 = arith.constant 0 : index
    %c0_3 = arith.constant 0 : index
    %1 = vector.load %arg2[%c0_1, %c0_2, %c0_3] : memref<1x16x16xf32, #tpu.memory_space<vmem>>, vector<1x16x16xf32>
    %2 = vector.shape_cast %1 : vector<1x16x16xf32> to vector<16x16xf32>
    %cst = arith.constant 5.000000e-01 : f32
    %3 = vector.broadcast %cst : f32 to vector<16x16xf32>
    %4 = arith.cmpf ogt, %2, %3 : vector<16x16xf32>
    %cst_4 = arith.constant 0.000000e+00 : f32
    %cst_5 = arith.constant -1.000000e+30 : f32
    %5 = vector.broadcast %cst_4 : f32 to vector<16x16xf32>
    %6 = vector.broadcast %cst_5 : f32 to vector<16x16xf32>
    %7 = arith.select %4, %5, %6 : vector<16x16xi1>, vector<16x16xf32>
    %8 = arith.index_cast %arg0 : i32 to index
    %c0_6 = arith.constant 0 : index
    %c0_7 = arith.constant 0 : index
    %9 = vector.load %arg3[%8, %c0_6, %c0_7] : memref<2x8x72xf32, #tpu.memory_space<vmem>>, vector<1x8x72xf32>
    %10 = vector.shape_cast %9 : vector<1x8x72xf32> to vector<8x72xf32>
    %11 = arith.index_cast %arg0 : i32 to index
    %c0_8 = arith.constant 0 : index
    %c0_9 = arith.constant 0 : index
    %12 = vector.load %arg4[%11, %c0_8, %c0_9] : memref<2x1x64xf32, #tpu.memory_space<vmem>>, vector<1x1x64xf32>
    %13 = vector.shape_cast %12 : vector<1x1x64xf32> to vector<1x64xf32>
    %14 = arith.index_cast %arg0 : i32 to index
    %c0_10 = arith.constant 0 : index
    %c0_11 = arith.constant 0 : index
    %15 = vector.load %arg5[%14, %c0_10, %c0_11] : memref<2x64x34xf32, #tpu.memory_space<vmem>>, vector<1x64x34xf32>
    %16 = vector.shape_cast %15 : vector<1x64x34xf32> to vector<64x34xf32>
    %17 = arith.index_cast %arg0 : i32 to index
    %c0_12 = arith.constant 0 : index
    %c0_13 = arith.constant 0 : index
    %18 = vector.load %arg6[%17, %c0_12, %c0_13] : memref<2x1x32xf32, #tpu.memory_space<vmem>>, vector<1x1x32xf32>
    %19 = vector.shape_cast %18 : vector<1x1x32xf32> to vector<1x32xf32>
    %cst_14 = arith.constant dense<0.000000e+00> : vector<16x72xf32>
    %20 = tpu.matmul %0, %10, %cst_14 {dimension_numbers = #tpu.dot_dimension_numbers<[1], [0], [0], [1], [0, 0, 1, 1], [], []>} : vector<16x8xf32>, vector<8x72xf32>, vector<16x72xf32> -> vector<16x72xf32>
    %21 = vector.extract_strided_slice %20 {offsets = [0, 0], sizes = [16, 64], strides = [1, 1]} : vector<16x72xf32> to vector<16x64xf32>
    %22 = vector.extract_strided_slice %20 {offsets = [0, 64], sizes = [16, 4], strides = [1, 1]} : vector<16x72xf32> to vector<16x4xf32>
    %23 = vector.extract_strided_slice %20 {offsets = [0, 68], sizes = [16, 4], strides = [1, 1]} : vector<16x72xf32> to vector<16x4xf32>
    %24 = tpu.transpose %23, [1, 0] : vector<16x4xf32> -> vector<4x16xf32>
    %25 = vector.shape_cast %24 : vector<4x16xf32> to vector<4x16x1xf32>
    %26 = tpu.transpose %22, [1, 0] : vector<16x4xf32> -> vector<4x16xf32>
    %27 = vector.shape_cast %26 : vector<4x16xf32> to vector<4x1x16xf32>
    %28 = vector.broadcast %25 : vector<4x16x1xf32> to vector<4x16x16xf32>
    %29 = vector.broadcast %27 : vector<4x1x16xf32> to vector<4x16x16xf32>
    %30 = arith.addf %28, %29 : vector<4x16x16xf32>
    %cst_15 = arith.constant 0.000000e+00 : f32
    %31 = vector.broadcast %cst_15 : f32 to vector<4x16x16xf32>
    %32 = arith.cmpf ogt, %30, %31 : vector<4x16x16xf32>
    %cst_16 = arith.constant 2.000000e-01 : f32
    %33 = vector.broadcast %cst_16 : f32 to vector<4x16x16xf32>
    %34 = arith.mulf %33, %30 : vector<4x16x16xf32>
    %35 = arith.select %32, %30, %34 : vector<4x16x16xi1>, vector<4x16x16xf32>
    %36 = vector.shape_cast %7 : vector<16x16xf32> to vector<1x16x16xf32>
    %37 = vector.broadcast %36 : vector<1x16x16xf32> to vector<4x16x16xf32>
    %38 = arith.addf %35, %37 : vector<4x16x16xf32>
    %cst_17 = arith.constant dense<0xFF800000> : vector<4x16xf32>
    %39 = vector.multi_reduction <maximumf>, %38, %cst_17 [2] : vector<4x16x16xf32> to vector<4x16xf32>
    %40 = vector.shape_cast %39 : vector<4x16xf32> to vector<4x16x1xf32>
    %41 = vector.broadcast %40 : vector<4x16x1xf32> to vector<4x16x16xf32>
    %42 = arith.subf %38, %41 : vector<4x16x16xf32>
    %43 = math.exp %42 : vector<4x16x16xf32>
    %cst_18 = arith.constant dense<0.000000e+00> : vector<4x16xf32>
    %44 = vector.multi_reduction <add>, %43, %cst_18 [2] : vector<4x16x16xf32> to vector<4x16xf32>
    %45 = vector.shape_cast %44 : vector<4x16xf32> to vector<4x16x1xf32>
    %46 = vector.broadcast %45 : vector<4x16x1xf32> to vector<4x16x16xf32>
    %47 = arith.divf %43, %46 : vector<4x16x16xf32>
    %48 = vector.extract_strided_slice %21 {offsets = [0, 0], sizes = [16, 16], strides = [1, 1]} : vector<16x64xf32> to vector<16x16xf32>
    %49 = vector.extract_strided_slice %21 {offsets = [0, 16], sizes = [16, 16], strides = [1, 1]} : vector<16x64xf32> to vector<16x16xf32>
    %50 = vector.extract_strided_slice %21 {offsets = [0, 32], sizes = [16, 16], strides = [1, 1]} : vector<16x64xf32> to vector<16x16xf32>
    %51 = vector.extract_strided_slice %21 {offsets = [0, 48], sizes = [16, 16], strides = [1, 1]} : vector<16x64xf32> to vector<16x16xf32>
    %52 = vector.shape_cast %48 : vector<16x16xf32> to vector<1x16x16xf32>
    %53 = vector.shape_cast %49 : vector<16x16xf32> to vector<1x16x16xf32>
    %54 = vector.shape_cast %50 : vector<16x16xf32> to vector<1x16x16xf32>
    %55 = vector.shape_cast %51 : vector<16x16xf32> to vector<1x16x16xf32>
    %56 = tpu.concatenate %52, %53, %54, %55 in 0 : vector<1x16x16xf32>, vector<1x16x16xf32>, vector<1x16x16xf32>, vector<1x16x16xf32> -> vector<4x16x16xf32>
    "tpu.trace_start"() <{level = 10 : i32, message = "hij,hjc->hic"}> : () -> ()
    %cst_19 = arith.constant dense<0.000000e+00> : vector<4x16x16xf32>
    %57 = tpu.matmul %47, %56, %cst_19 {dimension_numbers = #tpu.dot_dimension_numbers<[2], [1], [1], [2], [0, 0, 0, 1, 1, 2], [0], [0]>} : vector<4x16x16xf32>, vector<4x16x16xf32>, vector<4x16x16xf32> -> vector<4x16x16xf32>
    "tpu.trace_stop"() : () -> ()
    %58 = vector.extract_strided_slice %57 {offsets = [0, 0, 0], sizes = [1, 16, 16], strides = [1, 1, 1]} : vector<4x16x16xf32> to vector<1x16x16xf32>
    %59 = vector.shape_cast %58 : vector<1x16x16xf32> to vector<16x16xf32>
    %60 = vector.extract_strided_slice %57 {offsets = [1, 0, 0], sizes = [1, 16, 16], strides = [1, 1, 1]} : vector<4x16x16xf32> to vector<1x16x16xf32>
    %61 = vector.shape_cast %60 : vector<1x16x16xf32> to vector<16x16xf32>
    %62 = vector.extract_strided_slice %57 {offsets = [2, 0, 0], sizes = [1, 16, 16], strides = [1, 1, 1]} : vector<4x16x16xf32> to vector<1x16x16xf32>
    %63 = vector.shape_cast %62 : vector<1x16x16xf32> to vector<16x16xf32>
    %64 = vector.extract_strided_slice %57 {offsets = [3, 0, 0], sizes = [1, 16, 16], strides = [1, 1, 1]} : vector<4x16x16xf32> to vector<1x16x16xf32>
    %65 = vector.shape_cast %64 : vector<1x16x16xf32> to vector<16x16xf32>
    %66 = tpu.concatenate %59, %61, %63, %65 in 1 : vector<16x16xf32>, vector<16x16xf32>, vector<16x16xf32>, vector<16x16xf32> -> vector<16x64xf32>
    %67 = vector.broadcast %13 : vector<1x64xf32> to vector<16x64xf32>
    %68 = arith.addf %66, %67 : vector<16x64xf32>
    %cst_20 = arith.constant 0.000000e+00 : f32
    %69 = vector.broadcast %cst_20 : f32 to vector<16x64xf32>
    %70 = arith.cmpf ogt, %68, %69 : vector<16x64xf32>
    %71 = math.exp %68 : vector<16x64xf32>
    %cst_21 = arith.constant 1.000000e+00 : f32
    %72 = vector.broadcast %cst_21 : f32 to vector<16x64xf32>
    %73 = arith.subf %71, %72 : vector<16x64xf32>
    %74 = arith.select %70, %68, %73 : vector<16x64xi1>, vector<16x64xf32>
    %cst_22 = arith.constant dense<0.000000e+00> : vector<16x34xf32>
    %75 = tpu.matmul %74, %16, %cst_22 {dimension_numbers = #tpu.dot_dimension_numbers<[1], [0], [0], [1], [0, 0, 1, 1], [], []>} : vector<16x64xf32>, vector<64x34xf32>, vector<16x34xf32> -> vector<16x34xf32>
    %76 = vector.extract_strided_slice %75 {offsets = [0, 0], sizes = [16, 32], strides = [1, 1]} : vector<16x34xf32> to vector<16x32xf32>
    %77 = vector.extract_strided_slice %75 {offsets = [0, 32], sizes = [16, 1], strides = [1, 1]} : vector<16x34xf32> to vector<16x1xf32>
    %78 = vector.extract_strided_slice %75 {offsets = [0, 33], sizes = [16, 1], strides = [1, 1]} : vector<16x34xf32> to vector<16x1xf32>
    %79 = tpu.transpose %77, [1, 0] : vector<16x1xf32> -> vector<1x16xf32>
    %80 = vector.broadcast %78 : vector<16x1xf32> to vector<16x16xf32>
    %81 = vector.broadcast %79 : vector<1x16xf32> to vector<16x16xf32>
    %82 = arith.addf %80, %81 : vector<16x16xf32>
    %cst_23 = arith.constant 0.000000e+00 : f32
    %83 = vector.broadcast %cst_23 : f32 to vector<16x16xf32>
    %84 = arith.cmpf ogt, %82, %83 : vector<16x16xf32>
    %cst_24 = arith.constant 2.000000e-01 : f32
    %85 = vector.broadcast %cst_24 : f32 to vector<16x16xf32>
    %86 = arith.mulf %85, %82 : vector<16x16xf32>
    %87 = arith.select %84, %82, %86 : vector<16x16xi1>, vector<16x16xf32>
    %88 = arith.addf %87, %7 : vector<16x16xf32>
    %cst_25 = arith.constant dense<0xFF800000> : vector<16xf32>
    %89 = vector.multi_reduction <maximumf>, %88, %cst_25 [1] : vector<16x16xf32> to vector<16xf32>
    %90 = vector.shape_cast %89 : vector<16xf32> to vector<16x1xf32>
    %91 = vector.broadcast %90 : vector<16x1xf32> to vector<16x16xf32>
    %92 = arith.subf %88, %91 : vector<16x16xf32>
    %93 = math.exp %92 : vector<16x16xf32>
    %cst_26 = arith.constant dense<0.000000e+00> : vector<16xf32>
    %94 = vector.multi_reduction <add>, %93, %cst_26 [1] : vector<16x16xf32> to vector<16xf32>
    %95 = vector.shape_cast %94 : vector<16xf32> to vector<16x1xf32>
    %96 = vector.broadcast %95 : vector<16x1xf32> to vector<16x16xf32>
    %97 = arith.divf %93, %96 : vector<16x16xf32>
    %cst_27 = arith.constant dense<0.000000e+00> : vector<16x32xf32>
    %98 = tpu.matmul %97, %76, %cst_27 {dimension_numbers = #tpu.dot_dimension_numbers<[1], [0], [0], [1], [0, 0, 1, 1], [], []>} : vector<16x16xf32>, vector<16x32xf32>, vector<16x32xf32> -> vector<16x32xf32>
    %99 = vector.broadcast %19 : vector<1x32xf32> to vector<16x32xf32>
    %100 = arith.addf %98, %99 : vector<16x32xf32>
    %cst_28 = arith.constant dense<0xFF800000> : vector<16xf32>
    %101 = vector.multi_reduction <maximumf>, %100, %cst_28 [1] : vector<16x32xf32> to vector<16xf32>
    %102 = vector.shape_cast %101 : vector<16xf32> to vector<16x1xf32>
    %103 = vector.broadcast %102 : vector<16x1xf32> to vector<16x32xf32>
    %104 = arith.subf %100, %103 : vector<16x32xf32>
    %105 = math.exp %104 : vector<16x32xf32>
    %cst_29 = arith.constant dense<0.000000e+00> : vector<16xf32>
    %106 = vector.multi_reduction <add>, %105, %cst_29 [1] : vector<16x32xf32> to vector<16xf32>
    %107 = vector.shape_cast %106 : vector<16xf32> to vector<16x1xf32>
    %108 = math.log %107 : vector<16x1xf32>
    %109 = vector.broadcast %108 : vector<16x1xf32> to vector<16x32xf32>
    %110 = arith.subf %104, %109 : vector<16x32xf32>
    %c0_30 = arith.constant 0 : index
    %c0_31 = arith.constant 0 : index
    %c0_32 = arith.constant 0 : index
    %111 = vector.load %arg7[%c0_30, %c0_31, %c0_32] : memref<1x16x32xf32, #tpu.memory_space<vmem>>, vector<1x16x32xf32>
    %112 = vector.shape_cast %111 : vector<1x16x32xf32> to vector<16x32xf32>
    %113 = vector.shape_cast %110 : vector<16x32xf32> to vector<1x16x32xf32>
    tpu.vector_store %arg7[%c0_30, %c0_31, %c0_32], %113 {strides = array<i32>} : memref<1x16x32xf32, #tpu.memory_space<vmem>>, vector<1x16x32xf32>,
    return
  }
  func.func @transform_0(%arg0: i32) -> (i32, i32) {
    %c0_i32 = arith.constant 0 : i32
    %c0_i32_0 = arith.constant 0 : i32
    %c0_i32_1 = arith.constant 0 : i32
    return %c0_i32, %c0_i32_0 : i32, i32
  }
  func.func @transform_1(%arg0: i32) -> (i32, i32, i32) {
    %c0_i32 = arith.constant 0 : i32
    %c0_i32_0 = arith.constant 0 : i32
    %c0_i32_1 = arith.constant 0 : i32
    return %arg0, %c0_i32, %c0_i32_0 : i32, i32, i32
  }
  func.func @transform_2(%arg0: i32) -> (i32, i32, i32) {
    %c0_i32 = arith.constant 0 : i32
    %c0_i32_0 = arith.constant 0 : i32
    %c0_i32_1 = arith.constant 0 : i32
    %c0_i32_2 = arith.constant 0 : i32
    return %c0_i32, %c0_i32_0, %c0_i32_1 : i32, i32, i32
  }
  func.func @transform_3(%arg0: i32) -> (i32, i32, i32) {
    %c0_i32 = arith.constant 0 : i32
    %c0_i32_0 = arith.constant 0 : i32
    %c0_i32_1 = arith.constant 0 : i32
    %c0_i32_2 = arith.constant 0 : i32
    return %c0_i32, %c0_i32_0, %c0_i32_1 : i32, i32, i32
  }
  func.func @transform_4(%arg0: i32) -> (i32, i32, i32) {
    %c0_i32 = arith.constant 0 : i32
    %c0_i32_0 = arith.constant 0 : i32
    %c0_i32_1 = arith.constant 0 : i32
    %c0_i32_2 = arith.constant 0 : i32
    return %c0_i32, %c0_i32_0, %c0_i32_1 : i32, i32, i32
  }
  func.func @transform_5(%arg0: i32) -> (i32, i32, i32) {
    %c0_i32 = arith.constant 0 : i32
    %c0_i32_0 = arith.constant 0 : i32
    %c0_i32_1 = arith.constant 0 : i32
    %c0_i32_2 = arith.constant 0 : i32
    return %c0_i32, %c0_i32_0, %c0_i32_1 : i32, i32, i32
  }
  func.func @transform_6(%arg0: i32) -> (i32, i32, i32) {
    %c0_i32 = arith.constant 0 : i32
    %c0_i32_0 = arith.constant 0 : i32
    %c0_i32_1 = arith.constant 0 : i32
    return %arg0, %c0_i32, %c0_i32_0 : i32, i32, i32
  }
}

</mosaic_0001>

<llo_original>
// kernel: tpu_custom_call.1
$region0: #{tpu_custom_call.1}
  #allocation0 [shape = 'u32[]', space=smem, size = 0x4, offset = 0x4, fixed_abs, tag = 'smem constant byte address 0x4 - core index']
  #allocation1 [shape = 'u32[144,128]{1,0:T(1,128)}', space=vmem, size = 0x12000, scoped, tag = 'internal scratch']
  %s0 = inlined_call_operand.vmem [shape: f32[16,8], index: 0, kind: input, shape index: {}]
  %s1 = inlined_call_operand.vmem [shape: f32[2,16,16], index: 1, kind: input, shape index: {}]
  %s2 = inlined_call_operand.vmem [shape: f32[2,8,72], index: 2, kind: input, shape index: {}]
  %s3 = inlined_call_operand.vmem [shape: f32[2,1,64], index: 3, kind: input, shape index: {}]
  %s4 = inlined_call_operand.vmem [shape: f32[2,64,34], index: 4, kind: input, shape index: {}]
  %s5 = inlined_call_operand.vmem [shape: f32[2,1,32], index: 5, kind: input, shape index: {}]
  %s6 = inlined_call_operand.hbm [shape: f32[2,16,32], index: 6, kind: output, shape index: {}]
  %s7 = sld [smem:[#allocation0]]
  $region57: #{tpu_custom_call.1} parent=0
    _
  %s9 = ssub.s32 1, %s7
  %s10 = scalar_select 0, %s9, %s7
  $region1: #{tpu_custom_call.1} parent=0
    #allocation2 [shape = 'u8[16384]{0}', space=vmem, size = 0x4000, scoped, tag = 'output window, operand 0']
    #allocation3 [shape = 's32[2]{0}', space=sflag, size = 0x8, scoped, tag = 'scoped memory for tpu_custom_call.1']
    %11 = vsyncpa [#allocation3], 0
    %s12 = scalar_lea.sflag [#allocation3], 1
    %13 = vsyncpa %s12, 0
    loop: start=0, step=1, limit=4
    $region2: #{tpu_custom_call.1} parent=1 // loop_pre_header
      _
    $region3: #{tpu_custom_call.1} parent=1 // loop_header
      %s15 = sphi 0, %s19
      %p16 = scmp.ge.s32.totalorder %s15, 4
      %s23 = sphi 0, %s23
      %s25 = sphi 0, %s23
      %s26 = sphi 0, %s25
      %s40 = sphi 0, %s26
      %s46 = sphi 0, %s48
      %s49 = sphi 0, %s46
      %s50 = sphi 0, %s49
      %s66 = sphi 0, %s50
      %s70 = sphi 0, %s70
      %s72 = sphi 0, %s70
      %s73 = sphi 0, %s72
      %s87 = sphi 0, %s73
      %s91 = sphi 0, %s91
      %s93 = sphi 0, %s91
      %s94 = sphi 0, %s93
      %s108 = sphi 0, %s94
      %s112 = sphi 0, %s112
      %s114 = sphi 0, %s112
      %s115 = sphi 0, %s114
      %s129 = sphi 0, %s115
      %s133 = sphi 0, %s133
      %s135 = sphi 0, %s133
      %s136 = sphi 0, %s135
      %s150 = sphi 0, %s136
      %s156 = sphi 0, %s158
      %s159 = sphi 0, %s156
      %s160 = sphi 0, %s159
      %s176 = sphi 0, %s160
    $region4: #{tpu_custom_call.1} parent=1 // loop_header_branch
      %18 = sbr.rel (%p16) target = $region8
    $region5: #{tpu_custom_call.1} parent=1 // loop_body
      %s20 = ssub.s32 %s15, 1
      %s21 = ssub.s32 %s15, 2
      %s22 = sadd.s32 %s15, 1
      %s24 = sadd.s32 %s23, 1
      %p27 = scmp.eq.s32.totalorder %s15, 1
      %p28 = scmp.ne.s32.totalorder %s23, %s25
      %p29 = scmp.eq.s32.totalorder %s15, 0
      %p30 = por %p28, %p29
      %p31 = scmp.ne.s32.totalorder %s23, %s25
      %p32 = scmp.eq.s32.totalorder %s20, 1
      %p33 = por %p31, %p32
      %p34 = scmp.ne.s32.totalorder %s25, %s26
      %p35 = scmp.eq.s32.totalorder %s20, 0
      %p36 = por %p34, %p35
      %p37 = scmp.ne.s32.totalorder %s25, %s26
      %p38 = scmp.eq.s32.totalorder %s21, 1
      %p39 = por %p37, %p38
      %p41 = scmp.ne.s32.totalorder %s26, %s40
      %p42 = scmp.eq.s32.totalorder %s21, 0
      %p43 = por %p41, %p42
      %s44 = ssub.s32 %s15, %s22
      %p45 = scmp.eq.s32.totalorder %s44, 0
      %s47 = sadd.s32 %s46, 1
      %s48 = scalar_select %p45, %s46, %s47
      %p51 = pneg %p45
      %p52 = scmp.eq.s32.totalorder %s15, 1
      %p53 = por %p51, %p52
      %p54 = scmp.ne.s32.totalorder %s46, %s49
      %p55 = scmp.eq.s32.totalorder %s15, 0
      %p56 = por %p54, %p55
      %p57 = scmp.ne.s32.totalorder %s46, %s49
      %p58 = scmp.eq.s32.totalorder %s20, 1
      %p59 = por %p57, %p58
      %p60 = scmp.ne.s32.totalorder %s49, %s50
      %p61 = scmp.eq.s32.totalorder %s20, 0
      %p62 = por %p60, %p61
      %p63 = scmp.ne.s32.totalorder %s49, %s50
      %p64 = scmp.eq.s32.totalorder %s21, 1
      %p65 = por %p63, %p64
      %p67 = scmp.ne.s32.totalorder %s50, %s66
      %p68 = scmp.eq.s32.totalorder %s21, 0
      %p69 = por %p67, %p68
      %s71 = sadd.s32 %s70, 1
      %p74 = scmp.eq.s32.totalorder %s15, 1
      %p75 = scmp.ne.s32.totalorder %s70, %s72
      %p76 = scmp.eq.s32.totalorder %s15, 0
      %p77 = por %p75, %p76
      %p78 = scmp.ne.s32.totalorder %s70, %s72
      %p79 = scmp.eq.s32.totalorder %s20, 1
      %p80 = por %p78, %p79
      %p81 = scmp.ne.s32.totalorder %s72, %s73
      %p82 = scmp.eq.s32.totalorder %s20, 0
      %p83 = por %p81, %p82
      %p84 = scmp.ne.s32.totalorder %s72, %s73
      %p85 = scmp.eq.s32.totalorder %s21, 1
      %p86 = por %p84, %p85
      %p88 = scmp.ne.s32.totalorder %s73, %s87
      %p89 = scmp.eq.s32.totalorder %s21, 0
      %p90 = por %p88, %p89
      %s92 = sadd.s32 %s91, 1
      %p95 = scmp.eq.s32.totalorder %s15, 1
      %p96 = scmp.ne.s32.totalorder %s91, %s93
      %p97 = scmp.eq.s32.totalorder %s15, 0
      %p98 = por %p96, %p97
      %p99 = scmp.ne.s32.totalorder %s91, %s93
      %p100 = scmp.eq.s32.totalorder %s20, 1
      %p101 = por %p99, %p100
      %p102 = scmp.ne.s32.totalorder %s93, %s94
      %p103 = scmp.eq.s32.totalorder %s20, 0
      %p104 = por %p102, %p103
      %p105 = scmp.ne.s32.totalorder %s93, %s94
      %p106 = scmp.eq.s32.totalorder %s21, 1
      %p107 = por %p105, %p106
      %p109 = scmp.ne.s32.totalorder %s94, %s108
      %p110 = scmp.eq.s32.totalorder %s21, 0
      %p111 = por %p109, %p110
      %s113 = sadd.s32 %s112, 1
      %p116 = scmp.eq.s32.totalorder %s15, 1
      %p117 = scmp.ne.s32.totalorder %s112, %s114
      %p118 = scmp.eq.s32.totalorder %s15, 0
      %p119 = por %p117, %p118
      %p120 = scmp.ne.s32.totalorder %s112, %s114
      %p121 = scmp.eq.s32.totalorder %s20, 1
      %p122 = por %p120, %p121
      %p123 = scmp.ne.s32.totalorder %s114, %s115
      %p124 = scmp.eq.s32.totalorder %s20, 0
      %p125 = por %p123, %p124
      %p126 = scmp.ne.s32.totalorder %s114, %s115
      %p127 = scmp.eq.s32.totalorder %s21, 1
      %p128 = por %p126, %p127
      %p130 = scmp.ne.s32.totalorder %s115, %s129
      %p131 = scmp.eq.s32.totalorder %s21, 0
      %p132 = por %p130, %p131
      %s134 = sadd.s32 %s133, 1
      %p137 = scmp.eq.s32.totalorder %s15, 1
      %p138 = scmp.ne.s32.totalorder %s133, %s135
      %p139 = scmp.eq.s32.totalorder %s15, 0
      %p140 = por %p138, %p139
      %p141 = scmp.ne.s32.totalorder %s133, %s135
      %p142 = scmp.eq.s32.totalorder %s20, 1
      %p143 = por %p141, %p142
      %p144 = scmp.ne.s32.totalorder %s135, %s136
      %p145 = scmp.eq.s32.totalorder %s20, 0
      %p146 = por %p144, %p145
      %p147 = scmp.ne.s32.totalorder %s135, %s136
      %p148 = scmp.eq.s32.totalorder %s21, 1
      %p149 = por %p147, %p148
      %p151 = scmp.ne.s32.totalorder %s136, %s150
      %p152 = scmp.eq.s32.totalorder %s21, 0
      %p153 = por %p151, %p152
      %s154 = ssub.s32 %s15, %s22
      %p155 = scmp.eq.s32.totalorder %s154, 0
      %s157 = sadd.s32 %s156, 1
      %s158 = scalar_select %p155, %s156, %s157
      %p161 = pneg %p155
      %p162 = scmp.eq.s32.totalorder %s15, 1
      %p163 = por %p161, %p162
      %p164 = scmp.ne.s32.totalorder %s156, %s159
      %p165 = scmp.eq.s32.totalorder %s15, 0
      %p166 = por %p164, %p165
      %p167 = scmp.ne.s32.totalorder %s156, %s159
      %p168 = scmp.eq.s32.totalorder %s20, 1
      %p169 = por %p167, %p168
      %p170 = scmp.ne.s32.totalorder %s159, %s160
      %p171 = scmp.eq.s32.totalorder %s20, 0
      %p172 = por %p170, %p171
      %p173 = scmp.ne.s32.totalorder %s159, %s160
      %p174 = scmp.eq.s32.totalorder %s21, 1
      %p175 = por %p173, %p174
      %p177 = scmp.ne.s32.totalorder %s160, %s176
      %p178 = scmp.eq.s32.totalorder %s21, 0
      %p179 = por %p177, %p178
      %p180 = scmp.le.s32.totalorder 1, %s15
      %p181 = scmp.lt.s32.totalorder %s15, 3
      %p182 = pnand %p180, %p181
      %p183 = pneg %p182
      // Predicated region
      $region9: #{tpu_custom_call.1} parent=5 // pred_check
        _
      $region10: #{tpu_custom_call.1} parent=5 // pred_check_branch
        %185 = sbr.rel (%p182) target = $region12
      $region11: #{tpu_custom_call.1} parent=5 // pred_region
        %s186 = ssub.s32 %s15, 1
        // Predicated region
        $region13: #{tpu_custom_call.1} parent=11 // pred_check
          %p187 = pneg %p36
        $region14: #{tpu_custom_call.1} parent=11 // pred_check_branch
          %189 = sbr.rel (%p187) target = $region16
        $region15: #{tpu_custom_call.1} parent=11 // pred_region
          _
        $region16: #{tpu_custom_call.1} parent=11 // pred_fallthru
          _
        // Predicated region
        $region17: #{tpu_custom_call.1} parent=11 // pred_check
          %p190 = pneg %p83
        $region18: #{tpu_custom_call.1} parent=11 // pred_check_branch
          %192 = sbr.rel (%p190) target = $region20
        $region19: #{tpu_custom_call.1} parent=11 // pred_region
          _
        $region20: #{tpu_custom_call.1} parent=11 // pred_fallthru
          _
        // Predicated region
        $region21: #{tpu_custom_call.1} parent=11 // pred_check
          %p193 = pneg %p104
        $region22: #{tpu_custom_call.1} parent=11 // pred_check_branch
          %195 = sbr.rel (%p193) target = $region24
        $region23: #{tpu_custom_call.1} parent=11 // pred_region
          _
        $region24: #{tpu_custom_call.1} parent=11 // pred_fallthru
          _
        // Predicated region
        $region25: #{tpu_custom_call.1} parent=11 // pred_check
          %p196 = pneg %p125
        $region26: #{tpu_custom_call.1} parent=11 // pred_check_branch
          %198 = sbr.rel (%p196) target = $region28
        $region27: #{tpu_custom_call.1} parent=11 // pred_region
          _
        $region28: #{tpu_custom_call.1} parent=11 // pred_fallthru
          _
        // Predicated region
        $region29: #{tpu_custom_call.1} parent=11 // pred_check
          %p199 = pneg %p146
        $region30: #{tpu_custom_call.1} parent=11 // pred_check_branch
          %201 = sbr.rel (%p199) target = $region32
        $region31: #{tpu_custom_call.1} parent=11 // pred_region
          _
        $region32: #{tpu_custom_call.1} parent=11 // pred_fallthru
          _
      $region12: #{tpu_custom_call.1} parent=5 // pred_fallthru
        _
      %p202 = scmp.lt.s32.totalorder %s15, 2
      // Predicated region
      $region33: #{tpu_custom_call.1} parent=5 // pred_check
        %p203 = pneg %p202
      $region34: #{tpu_custom_call.1} parent=5 // pred_check_branch
        %205 = sbr.rel (%p203) target = $region36
      $region35: #{tpu_custom_call.1} parent=5 // pred_region
        // Predicated region
        $region37: #{tpu_custom_call.1} parent=35 // pred_check
          %p206 = pneg %p56
        $region38: #{tpu_custom_call.1} parent=35 // pred_check_branch
          %208 = sbr.rel (%p206) target = $region40
        $region39: #{tpu_custom_call.1} parent=35 // pred_region
          %p209 = scmp.lt.s32.totalorder %s15, 1
          %s210 = scalar_select %p209, %s15, 1
          %s211 = smul.addr %s210, 2
          %s212 = smul.addr %s211, 8
          %s213 = scalar_lea.vmem %s1, %s212
        $region40: #{tpu_custom_call.1} parent=35 // pred_fallthru
          _
      $region36: #{tpu_custom_call.1} parent=5 // pred_fallthru
        _
      %p214 = scmp.le.s32.totalorder 1, %s15
      %p215 = scmp.lt.s32.totalorder %s15, 3
      %p216 = pnand %p214, %p215
      %p217 = pneg %p216
      // Predicated region
      $region41: #{tpu_custom_call.1} parent=5 // pred_check
        _
      $region42: #{tpu_custom_call.1} parent=5 // pred_check_branch
        %219 = sbr.rel (%p216) target = $region44
      $region43: #{tpu_custom_call.1} parent=5 // pred_region
        %s220 = ssub.s32 %s15, 1
        %p221 = pneg %p36
        %p222 = pneg %p33
        %p223 = scmp.lt.s32.totalorder %s20, 1
        %s224 = scalar_select %p223, %s20, 1
        %s225 = smul.addr %s224, 2
        %s226 = smul.addr %s225, 8
        %s227 = scalar_lea.vmem %s1, %s226
        %p228 = pneg %p62
        %p229 = pneg %p59
        %p230 = pneg %p83
        %p231 = pneg %p80
        %p232 = pneg %p104
        %p233 = pneg %p101
        %p234 = pneg %p125
        %p235 = pneg %p122
        %p236 = pneg %p146
        %p237 = pneg %p143
        %p238 = pneg %p172
        %p239 = pneg %p169
        %s240 = sand.u32 %s159, 1
        %s241 = scalar_lea.sflag [#allocation3], %s240
        %s242 = sand.u32 %s159, 1
        %s243 = smul.addr %s242, 16
        %s244 = scalar_lea.vmem [#allocation2], %s243
        %p245 = scmp.lt.s32.totalorder %s20, 1
        %s246 = scalar_select %p245, %s20, 1
        %s247 = smul.addr %s246, 2
        %s248 = smul.addr %s247, 8
        %s249 = scalar_lea.vmem %s1, %s248
        %v250 = vld [vmem:[%s0] sm:$0xff]
        %v251 = vld [vmem:[%s0 + $0x8] sm:$0xff]
        %v252 = vld [vmem:[%s249] sm:$0xff]
        %v253 = vld [vmem:[%s249 + $0x8] sm:$0xff]
        %vm254 = vcmp.gt.f32.partialorder %v252, 0.5
        %vm255 = vcmp.gt.f32.partialorder %v253, 0.5
        %v256 = vsel %vm254, 0.0, -1e+30
        %v257 = vsel %vm255, 0.0, -1e+30
        %s258 = smul.u32 %s20, 8
        %s259 = scalar_lea.vmem %s2, %s258
        %v260 = vld [vmem:[%s259] sm:$0xff]
        %s261 = scalar_lea.vmem %s3, %s20
        %v262 = vld [vmem:[%s261] sm:$0x1]
        %s263 = smul.u32 %s20, 64
        %s264 = scalar_lea.vmem %s4, %s263
        %v265 = vld [vmem:[%s264] sm:$0xff]
        %v266 = vld [vmem:[%s264 + $0x8] sm:$0xff]
        %v267 = vld [vmem:[%s264 + $0x10] sm:$0xff]
        %v268 = vld [vmem:[%s264 + $0x18] sm:$0xff]
        %v269 = vld [vmem:[%s264 + $0x20] sm:$0xff]
        %v270 = vld [vmem:[%s264 + $0x28] sm:$0xff]
        %v271 = vld [vmem:[%s264 + $0x30] sm:$0xff]
        %v272 = vld [vmem:[%s264 + $0x38] sm:$0xff]
        %s273 = scalar_lea.vmem %s5, %s20
        %v274 = vld [vmem:[%s273] sm:$0x1]
        %vm275 = vcmask 64512
        %v277 = vsel %vm275, %v250, 0
        %v280 = vsel %vm275, %v251, 0
        %282 = vmatprep.subr.mxu0 0.0
        %283 = vmatpush1.msra.mxu0 %v260
        %284 = vmatprep.subr.mxu0 0.0
        %285 = vmatpush1.msra.mxu0 0.0
        %286 = vmatprep.subr.mxu0 0.0
        %287 = vmatpush1.msra.mxu0 0.0
        %288 = vmatprep.subr.mxu0 0.0
        %289 = vmatpush1.msra.mxu0 0.0
        %290 = vmatprep.subr.mxu0 0.0
        %291 = vmatpush1.msra.mxu0 0.0
        %292 = vmatprep.subr.mxu0 0.0
        %293 = vmatpush1.msra.mxu0 0.0
        %294 = vmatprep.subr.mxu0 0.0
        %295 = vmatpush1.msra.mxu0 0.0
        %296 = vmatprep.subr.mxu0 0.0
        %297 = vmatpush1.msra.mxu0 0.0
        %298 = vmatprep.subr.mxu0 0.0
        %299 = vmatpush1.msra.mxu0 0.0
        %300 = vmatprep.subr.mxu0 0.0
        %301 = vmatpush1.msra.mxu0 0.0
        %302 = vmatprep.subr.mxu0 0.0
        %303 = vmatpush1.msra.mxu0 0.0
        %304 = vmatprep.subr.mxu0 0.0
        %305 = vmatpush1.msra.mxu0 0.0
        %306 = vmatprep.subr.mxu0 0.0
        %307 = vmatpush1.msra.mxu0 0.0
        %308 = vmatprep.subr.mxu0 0.0
        %309 = vmatpush1.msra.mxu0 0.0
        %310 = vmatprep.subr.mxu0 0.0
        %311 = vmatpush1.msra.mxu0 0.0
        %312 = vmatprep.subr.mxu0 0.0
        %313 = vmatpush1.msra.mxu0 0.0
        %314 = vmatprep.subr.mxu0 0.0
        %315 = vmatpush1.msra.mxu0 0.0
        %316 = vmatprep.subr.mxu0 0.0
        %317 = vmatpush1.msra.mxu0 0.0
        %318 = vmatprep.subr.mxu0 0.0
        %319 = vmatpush1.msra.mxu0 0.0
        %320 = vmatprep.subr.mxu0 0.0
        %321 = vmatpush1.msra.mxu0 0.0
        %322 = vmatprep.subr.mxu0 0.0
        %323 = vmatpush1.msra.mxu0 0.0
        %324 = vmatprep.subr.mxu0 0.0
        %325 = vmatpush1.msra.mxu0 0.0
        %326 = vmatprep.subr.mxu0 0.0
        %327 = vmatpush1.msra.mxu0 0.0
        %328 = vmatprep.subr.mxu0 0.0
        %329 = vmatpush1.msra.mxu0 0.0
        %330 = vmatprep.subr.mxu0 0.0
        %331 = vmatpush1.msra.mxu0 0.0
        %332 = vmatprep.subr.mxu0 0.0
        %333 = vmatpush1.msra.mxu0 0.0
        %334 = vmatprep.subr.mxu0 0.0
        %335 = vmatpush1.msra.mxu0 0.0
        %336 = vmatprep.subr.mxu0 0.0
        %337 = vmatpush1.msra.mxu0 0.0
        %338 = vmatprep.subr.mxu0 0.0
        %339 = vmatpush1.msra.mxu0 0.0
        %340 = vmatprep.subr.mxu0 0.0
        %341 = vmatpush1.msra.mxu0 0.0
        %342 = vmatprep.subr.mxu0 0.0
        %343 = vmatpush1.msra.mxu0 0.0
        %344 = vmatprep.subr.mxu0 0.0
        %345 = vmatpush1.msra.mxu0 0.0
        %346 = vmatprep.mubr.f32.mxu0 0.0
        %347 = vmatmul.mubr.f32.gmra.mrb[0].mxu0 %v277
        %v348 = vpop.f32.mrb[0].mxu0
        %v349 = vadd.f32 0.0, %v348
        %v350 = vpop.f32.mrb[0].mxu0
        %351 = vmatprep.mubr.f32.mxu0 0.0
        %352 = vmatmul.mubr.f32.gmra.mrb[0].mxu0 %v280
        %v353 = vpop.f32.mrb[0].mxu0
        %v354 = vadd.f32 0.0, %v353
        %v355 = vpop.f32.mrb[0].mxu0
        %356 = vdwg.mxu0
        %359 = vrot.lane.b32.xlu0 %v349, 60
        %v360 = vpop.permute.xlu0 %359
        %361 = vrot.lane.b32.xlu0 %v354, 60
        %v362 = vpop.permute.xlu0 %361
        %365 = vxpose.xlu0.b32.start [1/16] %v360, 128
        %366 = vxpose.xlu0.b32.cont [2/16] %v362, 128
        %367 = vxpose.xlu0.b32.cont [3/16] 0.0, 128
        %368 = vxpose.xlu0.b32.cont [4/16] 0.0, 128
        %369 = vxpose.xlu0.b32.cont [5/16] 0.0, 128
        %370 = vxpose.xlu0.b32.cont [6/16] 0.0, 128
        %371 = vxpose.xlu0.b32.cont [7/16] 0.0, 128
        %372 = vxpose.xlu0.b32.cont [8/16] 0.0, 128
        %373 = vxpose.xlu0.b32.cont [9/16] 0.0, 128
        %374 = vxpose.xlu0.b32.cont [10/16] 0.0, 128
        %375 = vxpose.xlu0.b32.cont [11/16] 0.0, 128
        %376 = vxpose.xlu0.b32.cont [12/16] 0.0, 128
        %377 = vxpose.xlu0.b32.cont [13/16] 0.0, 128
        %378 = vxpose.xlu0.b32.cont [14/16] 0.0, 128
        %379 = vxpose.xlu0.b32.cont [15/16] 0.0, 128
        %380 = vxpose.xlu0.b32.end [16/16] 0.0, 128
        %v381 = vpop.trf.xlu0
        %v382 = vpop.trf.xlu0
        %v383 = vpop.trf.xlu0
        %v384 = vpop.trf.xlu0
        %v385 = vpop.trf.xlu0
        %v386 = vpop.trf.xlu0
        %v387 = vpop.trf.xlu0
        %v388 = vpop.trf.xlu0
        %v389 = vpop.trf.xlu0
        %v390 = vpop.trf.xlu0
        %v391 = vpop.trf.xlu0
        %v392 = vpop.trf.xlu0
        %v393 = vpop.trf.xlu0
        %v394 = vpop.trf.xlu0
        %v395 = vpop.trf.xlu0
        %v396 = vpop.trf.xlu0
        %v397 = vlaneseq
        %v398 = vshrl.u32 %v397, 7
        %v399 = vsub.s32 0, %v398
        %v400 = vrot.slane %v381, %v399
        %402 = vbcast.lane.b32.xlu0 %v400, 256
        %v403 = vpop.permute.xlu0 %402
        %s405 = sor.u32 256, 8
        %406 = vbcast.lane.b32.xlu0 %v400, %s405
        %v407 = vpop.permute.xlu0 %406
        %v408 = vlaneseq
        %v409 = vshrl.u32 %v408, 7
        %v410 = vsub.s32 1, %v409
        %v411 = vrot.slane %v381, %v410
        %413 = vbcast.lane.b32.xlu0 %v411, 256
        %v414 = vpop.permute.xlu0 %413
        %s416 = sor.u32 256, 8
        %417 = vbcast.lane.b32.xlu0 %v411, %s416
        %v418 = vpop.permute.xlu0 %417
        %v419 = vlaneseq
        %v420 = vshrl.u32 %v419, 7
        %v421 = vsub.s32 2, %v420
        %v422 = vrot.slane %v381, %v421
        %424 = vbcast.lane.b32.xlu0 %v422, 256
        %v425 = vpop.permute.xlu0 %424
        %s427 = sor.u32 256, 8
        %428 = vbcast.lane.b32.xlu0 %v422, %s427
        %v429 = vpop.permute.xlu0 %428
        %v430 = vlaneseq
        %v431 = vshrl.u32 %v430, 7
        %v432 = vsub.s32 3, %v431
        %v433 = vrot.slane %v381, %v432
        %435 = vbcast.lane.b32.xlu0 %v433, 256
        %v436 = vpop.permute.xlu0 %435
        %s438 = sor.u32 256, 8
        %439 = vbcast.lane.b32.xlu0 %v433, %s438
        %v440 = vpop.permute.xlu0 %439
        %441 = vrot.lane.b32.xlu0 %v349, 64
        %v442 = vpop.permute.xlu0 %441
        %443 = vrot.lane.b32.xlu0 %v354, 64
        %v444 = vpop.permute.xlu0 %443
        %447 = vxpose.xlu0.b32.start [1/16] %v442, 128
        %448 = vxpose.xlu0.b32.cont [2/16] %v444, 128
        %449 = vxpose.xlu0.b32.cont [3/16] 0.0, 128
        %450 = vxpose.xlu0.b32.cont [4/16] 0.0, 128
        %451 = vxpose.xlu0.b32.cont [5/16] 0.0, 128
        %452 = vxpose.xlu0.b32.cont [6/16] 0.0, 128
        %453 = vxpose.xlu0.b32.cont [7/16] 0.0, 128
        %454 = vxpose.xlu0.b32.cont [8/16] 0.0, 128
        %455 = vxpose.xlu0.b32.cont [9/16] 0.0, 128
        %456 = vxpose.xlu0.b32.cont [10/16] 0.0, 128
        %457 = vxpose.xlu0.b32.cont [11/16] 0.0, 128
        %458 = vxpose.xlu0.b32.cont [12/16] 0.0, 128
        %459 = vxpose.xlu0.b32.cont [13/16] 0.0, 128
        %460 = vxpose.xlu0.b32.cont [14/16] 0.0, 128
        %461 = vxpose.xlu0.b32.cont [15/16] 0.0, 128
        %462 = vxpose.xlu0.b32.end [16/16] 0.0, 128
        %v463 = vpop.trf.xlu0
        %v464 = vpop.trf.xlu0
        %v465 = vpop.trf.xlu0
        %v466 = vpop.trf.xlu0
        %v467 = vpop.trf.xlu0
        %v468 = vpop.trf.xlu0
        %v469 = vpop.trf.xlu0
        %v470 = vpop.trf.xlu0
        %v471 = vpop.trf.xlu0
        %v472 = vpop.trf.xlu0
        %v473 = vpop.trf.xlu0
        %v474 = vpop.trf.xlu0
        %v475 = vpop.trf.xlu0
        %v476 = vpop.trf.xlu0
        %v477 = vpop.trf.xlu0
        %v478 = vpop.trf.xlu0
        %v481 = vunpack.c.l.s4 1966171168
        %v482 = vunpack.c.0.s8 %v481
        %v483 = vlaneseq
        %v484 = vshrl.u32 %v483, 7
        %v485 = vsub.s32 %v482, %v484
        %v486 = vrot.slane %v463, %v485
        %v487 = vcombine.high %v486, %v486
        %v489 = vunpack.c.l.s4 1966171168
        %v490 = vunpack.c.0.s8 %v489
        %v491 = vlaneseq
        %v492 = vshrl.u32 %v491, 7
        %v493 = vsub.s32 %v490, %v492
        %v494 = vrot.slane %v486, %v493
        %v496 = vunpack.c.l.s4 1966171168
        %v497 = vunpack.c.0.s8 %v496
        %v498 = vlaneseq
        %v499 = vshrl.u32 %v498, 7
        %v500 = vsub.s32 %v497, %v499
        %v501 = vrot.slane %v487, %v500
        %v502 = vcombine.high %v494, %v494
        %v503 = vcombine.high %v501, %v501
        %v504 = vlaneseq
        %v505 = vshrl.u32 %v504, 7
        %v506 = vsub.s32 0, %v505
        %v507 = vrot.slane %v494, %v506
        %v508 = vlaneseq
        %v509 = vshrl.u32 %v508, 7
        %v510 = vsub.s32 0, %v509
        %v511 = vrot.slane %v501, %v510
        %v512 = vlaneseq
        %v513 = vshrl.u32 %v512, 7
        %v514 = vsub.s32 0, %v513
        %v515 = vrot.slane %v502, %v514
        %v516 = vlaneseq
        %v517 = vshrl.u32 %v516, 7
        %v518 = vsub.s32 0, %v517
        %v519 = vrot.slane %v503, %v518
        %v524 = vadd.f32 %v403, %v507
        %v525 = vadd.f32 %v407, %v507
        %v526 = vadd.f32 %v414, %v511
        %v527 = vadd.f32 %v418, %v511
        %v528 = vadd.f32 %v425, %v515
        %v529 = vadd.f32 %v429, %v515
        %v530 = vadd.f32 %v436, %v519
        %v531 = vadd.f32 %v440, %v519
        %vm532 = vcmp.gt.f32.partialorder %v524, 0.0
        %vm533 = vcmp.gt.f32.partialorder %v525, 0.0
        %vm534 = vcmp.gt.f32.partialorder %v526, 0.0
        %vm535 = vcmp.gt.f32.partialorder %v527, 0.0
        %vm536 = vcmp.gt.f32.partialorder %v528, 0.0
        %vm537 = vcmp.gt.f32.partialorder %v529, 0.0
        %vm538 = vcmp.gt.f32.partialorder %v530, 0.0
        %vm539 = vcmp.gt.f32.partialorder %v531, 0.0
        %v540 = vmul.f32 %v524, 0.2
        %v541 = vmul.f32 %v525, 0.2
        %v542 = vmul.f32 %v526, 0.2
        %v543 = vmul.f32 %v527, 0.2
        %v544 = vmul.f32 %v528, 0.2
        %v545 = vmul.f32 %v529, 0.2
        %v546 = vmul.f32 %v530, 0.2
        %v547 = vmul.f32 %v531, 0.2
        %v548 = vsel %vm532, %v524, %v540
        %v549 = vsel %vm533, %v525, %v541
        %v550 = vsel %vm534, %v526, %v542
        %v551 = vsel %vm535, %v527, %v543
        %v552 = vsel %vm536, %v528, %v544
        %v553 = vsel %vm537, %v529, %v545
        %v554 = vsel %vm538, %v530, %v546
        %v555 = vsel %vm539, %v531, %v547
        %v556 = vadd.f32 %v548, %v256
        %v557 = vadd.f32 %v549, %v257
        %v558 = vadd.f32 %v550, %v256
        %v559 = vadd.f32 %v551, %v257
        %v560 = vadd.f32 %v552, %v256
        %v561 = vadd.f32 %v553, %v257
        %v562 = vadd.f32 %v554, %v256
        %v563 = vadd.f32 %v555, %v257
        %vm564 = vcmask 130048
        %v565 = vsel %vm564, %v556, -inf
        %566 = vmax.xlane.f32.xlu0 %v565
        %v567 = vpop.xlane.xlu0 %566
        %v568 = vsel %vm564, %v557, -inf
        %569 = vmax.xlane.f32.xlu0 %v568
        %v570 = vpop.xlane.xlu0 %569
        %v571 = vsel %vm564, %v558, -inf
        %572 = vmax.xlane.f32.xlu0 %v571
        %v573 = vpop.xlane.xlu0 %572
        %v574 = vsel %vm564, %v559, -inf
        %575 = vmax.xlane.f32.xlu0 %v574
        %v576 = vpop.xlane.xlu0 %575
        %v577 = vsel %vm564, %v560, -inf
        %578 = vmax.xlane.f32.xlu0 %v577
        %v579 = vpop.xlane.xlu0 %578
        %v580 = vsel %vm564, %v561, -inf
        %581 = vmax.xlane.f32.xlu0 %v580
        %v582 = vpop.xlane.xlu0 %581
        %v583 = vsel %vm564, %v562, -inf
        %584 = vmax.xlane.f32.xlu0 %v583
        %v585 = vpop.xlane.xlu0 %584
        %v586 = vsel %vm564, %v563, -inf
        %587 = vmax.xlane.f32.xlu0 %v586
        %v588 = vpop.xlane.xlu0 %587
        %v589 = vsub.f32 %v556, %v567
        %v590 = vsub.f32 %v557, %v570
        %v591 = vsub.f32 %v558, %v573
        %v592 = vsub.f32 %v559, %v576
        %v593 = vsub.f32 %v560, %v579
        %v594 = vsub.f32 %v561, %v582
        %v595 = vsub.f32 %v562, %v585
        %v596 = vsub.f32 %v563, %v588
        %v597 = vmul.f32 %v589, 1.442695
        %v598 = vpow.pop %v597
        %v599 = vmul.f32 %v590, 1.442695
        %v600 = vpow.pop %v599
        %v601 = vmul.f32 %v591, 1.442695
        %v602 = vpow.pop %v601
        %v603 = vmul.f32 %v592, 1.442695
        %v604 = vpow.pop %v603
        %v605 = vmul.f32 %v593, 1.442695
        %v606 = vpow.pop %v605
        %v607 = vmul.f32 %v594, 1.442695
        %v608 = vpow.pop %v607
        %v609 = vmul.f32 %v595, 1.442695
        %v610 = vpow.pop %v609
        %v611 = vmul.f32 %v596, 1.442695
        %v612 = vpow.pop %v611
        %v613 = vsel %vm564, %v598, 0.0
        %614 = vadd.xlane.f32.xlu0 %v613
        %v615 = vpop.xlane.xlu0 %614
        %v616 = vsel %vm564, %v600, 0.0
        %617 = vadd.xlane.f32.xlu0 %v616
        %v618 = vpop.xlane.xlu0 %617
        %v619 = vsel %vm564, %v602, 0.0
        %620 = vadd.xlane.f32.xlu0 %v619
        %v621 = vpop.xlane.xlu0 %620
        %v622 = vsel %vm564, %v604, 0.0
        %623 = vadd.xlane.f32.xlu0 %v622
        %v624 = vpop.xlane.xlu0 %623
        %v625 = vsel %vm564, %v606, 0.0
        %626 = vadd.xlane.f32.xlu0 %v625
        %v627 = vpop.xlane.xlu0 %626
        %v628 = vsel %vm564, %v608, 0.0
        %629 = vadd.xlane.f32.xlu0 %v628
        %v630 = vpop.xlane.xlu0 %629
        %v631 = vsel %vm564, %v610, 0.0
        %632 = vadd.xlane.f32.xlu0 %v631
        %v633 = vpop.xlane.xlu0 %632
        %v634 = vsel %vm564, %v612, 0.0
        %635 = vadd.xlane.f32.xlu0 %v634
        %v636 = vpop.xlane.xlu0 %635
        %v637 = vrcp.pop %v615
        %v638 = vmul.f32 %v598, %v637
        %v639 = vrcp.pop %v618
        %v640 = vmul.f32 %v600, %v639
        %v641 = vrcp.pop %v621
        %v642 = vmul.f32 %v602, %v641
        %v643 = vrcp.pop %v624
        %v644 = vmul.f32 %v604, %v643
        %v645 = vrcp.pop %v627
        %v646 = vmul.f32 %v606, %v645
        %v647 = vrcp.pop %v630
        %v648 = vmul.f32 %v608, %v647
        %v649 = vrcp.pop %v633
        %v650 = vmul.f32 %v610, %v649
        %v651 = vrcp.pop %v636
        %v652 = vmul.f32 %v612, %v651
        %653 = vrot.lane.b32.xlu0 %v349, 112
        %v654 = vpop.permute.xlu0 %653
        %655 = vrot.lane.b32.xlu0 %v354, 112
        %v656 = vpop.permute.xlu0 %655
        %659 = vrot.lane.b32.xlu0 %v349, 96
        %v660 = vpop.permute.xlu0 %659
        %661 = vrot.lane.b32.xlu0 %v354, 96
        %v662 = vpop.permute.xlu0 %661
        %665 = vrot.lane.b32.xlu0 %v349, 80
        %v666 = vpop.permute.xlu0 %665
        %667 = vrot.lane.b32.xlu0 %v354, 80
        %v668 = vpop.permute.xlu0 %667
        %v672 = vsel %vm564, %v638, 0
        %v675 = vsel %vm564, %v640, 0
        %677 = vmatprep.subr.mxu0 0.0
        %678 = vmatpush1.msra.mxu0 %v349
        %679 = vmatprep.subr.mxu0 0.0
        %680 = vmatpush1.msra.mxu0 %v354
        %681 = vmatprep.subr.mxu0 0.0
        %682 = vmatpush1.msra.mxu0 0.0
        %683 = vmatprep.subr.mxu0 0.0
        %684 = vmatpush1.msra.mxu0 0.0
        %685 = vmatprep.subr.mxu0 0.0
        %686 = vmatpush1.msra.mxu0 0.0
        %687 = vmatprep.subr.mxu0 0.0
        %688 = vmatpush1.msra.mxu0 0.0
        %689 = vmatprep.subr.mxu0 0.0
        %690 = vmatpush1.msra.mxu0 0.0
        %691 = vmatprep.subr.mxu0 0.0
        %692 = vmatpush1.msra.mxu0 0.0
        %693 = vmatprep.subr.mxu0 0.0
        %694 = vmatpush1.msra.mxu0 0.0
        %695 = vmatprep.subr.mxu0 0.0
        %696 = vmatpush1.msra.mxu0 0.0
        %697 = vmatprep.subr.mxu0 0.0
        %698 = vmatpush1.msra.mxu0 0.0
        %699 = vmatprep.subr.mxu0 0.0
        %700 = vmatpush1.msra.mxu0 0.0
        %701 = vmatprep.subr.mxu0 0.0
        %702 = vmatpush1.msra.mxu0 0.0
        %703 = vmatprep.subr.mxu0 0.0
        %704 = vmatpush1.msra.mxu0 0.0
        %705 = vmatprep.subr.mxu0 0.0
        %706 = vmatpush1.msra.mxu0 0.0
        %707 = vmatprep.subr.mxu0 0.0
        %708 = vmatpush1.msra.mxu0 0.0
        %709 = vmatprep.subr.mxu0 0.0
        %710 = vmatpush1.msra.mxu0 0.0
        %711 = vmatprep.subr.mxu0 0.0
        %712 = vmatpush1.msra.mxu0 0.0
        %713 = vmatprep.subr.mxu0 0.0
        %714 = vmatpush1.msra.mxu0 0.0
        %715 = vmatprep.subr.mxu0 0.0
        %716 = vmatpush1.msra.mxu0 0.0
        %717 = vmatprep.subr.mxu0 0.0
        %718 = vmatpush1.msra.mxu0 0.0
        %719 = vmatprep.subr.mxu0 0.0
        %720 = vmatpush1.msra.mxu0 0.0
        %721 = vmatprep.subr.mxu0 0.0
        %722 = vmatpush1.msra.mxu0 0.0
        %723 = vmatprep.subr.mxu0 0.0
        %724 = vmatpush1.msra.mxu0 0.0
        %725 = vmatprep.subr.mxu0 0.0
        %726 = vmatpush1.msra.mxu0 0.0
        %727 = vmatprep.subr.mxu0 0.0
        %728 = vmatpush1.msra.mxu0 0.0
        %729 = vmatprep.subr.mxu0 0.0
        %730 = vmatpush1.msra.mxu0 0.0
        %731 = vmatprep.subr.mxu0 0.0
        %732 = vmatpush1.msra.mxu0 0.0
        %733 = vmatprep.subr.mxu0 0.0
        %734 = vmatpush1.msra.mxu0 0.0
        %735 = vmatprep.subr.mxu0 0.0
        %736 = vmatpush1.msra.mxu0 0.0
        %737 = vmatprep.subr.mxu0 0.0
        %738 = vmatpush1.msra.mxu0 0.0
        %739 = vmatprep.subr.mxu0 0.0
        %740 = vmatpush1.msra.mxu0 0.0
        %741 = vmatprep.mubr.f32.mxu0 0.0
        %742 = vmatmul.mubr.f32.gmra.mrb[0].mxu0 %v672
        %v743 = vpop.f32.mrb[0].mxu0
        %v744 = vadd.f32 0.0, %v743
        %v745 = vpop.f32.mrb[0].mxu0
        %746 = vmatprep.mubr.f32.mxu0 0.0
        %747 = vmatmul.mubr.f32.gmra.mrb[0].mxu0 %v675
        %v748 = vpop.f32.mrb[0].mxu0
        %v749 = vadd.f32 0.0, %v748
        %v750 = vpop.f32.mrb[0].mxu0
        %751 = vdwg.mxu0
        %v753 = vsel %vm564, %v642, 0
        %v756 = vsel %vm564, %v644, 0
        %758 = vmatprep.subr.mxu0 0.0
        %759 = vmatpush1.msra.mxu0 %v654
        %760 = vmatprep.subr.mxu0 0.0
        %761 = vmatpush1.msra.mxu0 %v656
        %762 = vmatprep.subr.mxu0 0.0
        %763 = vmatpush1.msra.mxu0 0.0
        %764 = vmatprep.subr.mxu0 0.0
        %765 = vmatpush1.msra.mxu0 0.0
        %766 = vmatprep.subr.mxu0 0.0
        %767 = vmatpush1.msra.mxu0 0.0
        %768 = vmatprep.subr.mxu0 0.0
        %769 = vmatpush1.msra.mxu0 0.0
        %770 = vmatprep.subr.mxu0 0.0
        %771 = vmatpush1.msra.mxu0 0.0
        %772 = vmatprep.subr.mxu0 0.0
        %773 = vmatpush1.msra.mxu0 0.0
        %774 = vmatprep.subr.mxu0 0.0
        %775 = vmatpush1.msra.mxu0 0.0
        %776 = vmatprep.subr.mxu0 0.0
        %777 = vmatpush1.msra.mxu0 0.0
        %778 = vmatprep.subr.mxu0 0.0
        %779 = vmatpush1.msra.mxu0 0.0
        %780 = vmatprep.subr.mxu0 0.0
        %781 = vmatpush1.msra.mxu0 0.0
        %782 = vmatprep.subr.mxu0 0.0
        %783 = vmatpush1.msra.mxu0 0.0
        %784 = vmatprep.subr.mxu0 0.0
        %785 = vmatpush1.msra.mxu0 0.0
        %786 = vmatprep.subr.mxu0 0.0
        %787 = vmatpush1.msra.mxu0 0.0
        %788 = vmatprep.subr.mxu0 0.0
        %789 = vmatpush1.msra.mxu0 0.0
        %790 = vmatprep.subr.mxu0 0.0
        %791 = vmatpush1.msra.mxu0 0.0
        %792 = vmatprep.subr.mxu0 0.0
        %793 = vmatpush1.msra.mxu0 0.0
        %794 = vmatprep.subr.mxu0 0.0
        %795 = vmatpush1.msra.mxu0 0.0
        %796 = vmatprep.subr.mxu0 0.0
        %797 = vmatpush1.msra.mxu0 0.0
        %798 = vmatprep.subr.mxu0 0.0
        %799 = vmatpush1.msra.mxu0 0.0
        %800 = vmatprep.subr.mxu0 0.0
        %801 = vmatpush1.msra.mxu0 0.0
        %802 = vmatprep.subr.mxu0 0.0
        %803 = vmatpush1.msra.mxu0 0.0
        %804 = vmatprep.subr.mxu0 0.0
        %805 = vmatpush1.msra.mxu0 0.0
        %806 = vmatprep.subr.mxu0 0.0
        %807 = vmatpush1.msra.mxu0 0.0
        %808 = vmatprep.subr.mxu0 0.0
        %809 = vmatpush1.msra.mxu0 0.0
        %810 = vmatprep.subr.mxu0 0.0
        %811 = vmatpush1.msra.mxu0 0.0
        %812 = vmatprep.subr.mxu0 0.0
        %813 = vmatpush1.msra.mxu0 0.0
        %814 = vmatprep.subr.mxu0 0.0
        %815 = vmatpush1.msra.mxu0 0.0
        %816 = vmatprep.subr.mxu0 0.0
        %817 = vmatpush1.msra.mxu0 0.0
        %818 = vmatprep.subr.mxu0 0.0
        %819 = vmatpush1.msra.mxu0 0.0
        %820 = vmatprep.subr.mxu0 0.0
        %821 = vmatpush1.msra.mxu0 0.0
        %822 = vmatprep.mubr.f32.mxu0 0.0
        %823 = vmatmul.mubr.f32.gmra.mrb[0].mxu0 %v753
        %v824 = vpop.f32.mrb[0].mxu0
        %v825 = vadd.f32 0.0, %v824
        %v826 = vpop.f32.mrb[0].mxu0
        %827 = vmatprep.mubr.f32.mxu0 0.0
        %828 = vmatmul.mubr.f32.gmra.mrb[0].mxu0 %v756
        %v829 = vpop.f32.mrb[0].mxu0
        %v830 = vadd.f32 0.0, %v829
        %v831 = vpop.f32.mrb[0].mxu0
        %832 = vdwg.mxu0
        %v834 = vsel %vm564, %v646, 0
        %v837 = vsel %vm564, %v648, 0
        %839 = vmatprep.subr.mxu0 0.0
        %840 = vmatpush1.msra.mxu0 %v660
        %841 = vmatprep.subr.mxu0 0.0
        %842 = vmatpush1.msra.mxu0 %v662
        %843 = vmatprep.subr.mxu0 0.0
        %844 = vmatpush1.msra.mxu0 0.0
        %845 = vmatprep.subr.mxu0 0.0
        %846 = vmatpush1.msra.mxu0 0.0
        %847 = vmatprep.subr.mxu0 0.0
        %848 = vmatpush1.msra.mxu0 0.0
        %849 = vmatprep.subr.mxu0 0.0
        %850 = vmatpush1.msra.mxu0 0.0
        %851 = vmatprep.subr.mxu0 0.0
        %852 = vmatpush1.msra.mxu0 0.0
        %853 = vmatprep.subr.mxu0 0.0
        %854 = vmatpush1.msra.mxu0 0.0
        %855 = vmatprep.subr.mxu0 0.0
        %856 = vmatpush1.msra.mxu0 0.0
        %857 = vmatprep.subr.mxu0 0.0
        %858 = vmatpush1.msra.mxu0 0.0
        %859 = vmatprep.subr.mxu0 0.0
        %860 = vmatpush1.msra.mxu0 0.0
        %861 = vmatprep.subr.mxu0 0.0
        %862 = vmatpush1.msra.mxu0 0.0
        %863 = vmatprep.subr.mxu0 0.0
        %864 = vmatpush1.msra.mxu0 0.0
        %865 = vmatprep.subr.mxu0 0.0
        %866 = vmatpush1.msra.mxu0 0.0
        %867 = vmatprep.subr.mxu0 0.0
        %868 = vmatpush1.msra.mxu0 0.0
        %869 = vmatprep.subr.mxu0 0.0
        %870 = vmatpush1.msra.mxu0 0.0
        %871 = vmatprep.subr.mxu0 0.0
        %872 = vmatpush1.msra.mxu0 0.0
        %873 = vmatprep.subr.mxu0 0.0
        %874 = vmatpush1.msra.mxu0 0.0
        %875 = vmatprep.subr.mxu0 0.0
        %876 = vmatpush1.msra.mxu0 0.0
        %877 = vmatprep.subr.mxu0 0.0
        %878 = vmatpush1.msra.mxu0 0.0
        %879 = vmatprep.subr.mxu0 0.0
        %880 = vmatpush1.msra.mxu0 0.0
        %881 = vmatprep.subr.mxu0 0.0
        %882 = vmatpush1.msra.mxu0 0.0
        %883 = vmatprep.subr.mxu0 0.0
        %884 = vmatpush1.msra.mxu0 0.0
        %885 = vmatprep.subr.mxu0 0.0
        %886 = vmatpush1.msra.mxu0 0.0
        %887 = vmatprep.subr.mxu0 0.0
        %888 = vmatpush1.msra.mxu0 0.0
        %889 = vmatprep.subr.mxu0 0.0
        %890 = vmatpush1.msra.mxu0 0.0
        %891 = vmatprep.subr.mxu0 0.0
        %892 = vmatpush1.msra.mxu0 0.0
        %893 = vmatprep.subr.mxu0 0.0
        %894 = vmatpush1.msra.mxu0 0.0
        %895 = vmatprep.subr.mxu0 0.0
        %896 = vmatpush1.msra.mxu0 0.0
        %897 = vmatprep.subr.mxu0 0.0
        %898 = vmatpush1.msra.mxu0 0.0
        %899 = vmatprep.subr.mxu0 0.0
        %900 = vmatpush1.msra.mxu0 0.0
        %901 = vmatprep.subr.mxu0 0.0
        %902 = vmatpush1.msra.mxu0 0.0
        %903 = vmatprep.mubr.f32.mxu0 0.0
        %904 = vmatmul.mubr.f32.gmra.mrb[0].mxu0 %v834
        %v905 = vpop.f32.mrb[0].mxu0
        %v906 = vadd.f32 0.0, %v905
        %v907 = vpop.f32.mrb[0].mxu0
        %908 = vmatprep.mubr.f32.mxu0 0.0
        %909 = vmatmul.mubr.f32.gmra.mrb[0].mxu0 %v837
        %v910 = vpop.f32.mrb[0].mxu0
        %v911 = vadd.f32 0.0, %v910
        %v912 = vpop.f32.mrb[0].mxu0
        %913 = vdwg.mxu0
        %v915 = vsel %vm564, %v650, 0
        %v918 = vsel %vm564, %v652, 0
        %920 = vmatprep.subr.mxu0 0.0
        %921 = vmatpush1.msra.mxu0 %v666
        %922 = vmatprep.subr.mxu0 0.0
        %923 = vmatpush1.msra.mxu0 %v668
        %924 = vmatprep.subr.mxu0 0.0
        %925 = vmatpush1.msra.mxu0 0.0
        %926 = vmatprep.subr.mxu0 0.0
        %927 = vmatpush1.msra.mxu0 0.0
        %928 = vmatprep.subr.mxu0 0.0
        %929 = vmatpush1.msra.mxu0 0.0
        %930 = vmatprep.subr.mxu0 0.0
        %931 = vmatpush1.msra.mxu0 0.0
        %932 = vmatprep.subr.mxu0 0.0
        %933 = vmatpush1.msra.mxu0 0.0
        %934 = vmatprep.subr.mxu0 0.0
        %935 = vmatpush1.msra.mxu0 0.0
        %936 = vmatprep.subr.mxu0 0.0
        %937 = vmatpush1.msra.mxu0 0.0
        %938 = vmatprep.subr.mxu0 0.0
        %939 = vmatpush1.msra.mxu0 0.0
        %940 = vmatprep.subr.mxu0 0.0
        %941 = vmatpush1.msra.mxu0 0.0
        %942 = vmatprep.subr.mxu0 0.0
        %943 = vmatpush1.msra.mxu0 0.0
        %944 = vmatprep.subr.mxu0 0.0
        %945 = vmatpush1.msra.mxu0 0.0
        %946 = vmatprep.subr.mxu0 0.0
        %947 = vmatpush1.msra.mxu0 0.0
        %948 = vmatprep.subr.mxu0 0.0
        %949 = vmatpush1.msra.mxu0 0.0
        %950 = vmatprep.subr.mxu0 0.0
        %951 = vmatpush1.msra.mxu0 0.0
        %952 = vmatprep.subr.mxu0 0.0
        %953 = vmatpush1.msra.mxu0 0.0
        %954 = vmatprep.subr.mxu0 0.0
        %955 = vmatpush1.msra.mxu0 0.0
        %956 = vmatprep.subr.mxu0 0.0
        %957 = vmatpush1.msra.mxu0 0.0
        %958 = vmatprep.subr.mxu0 0.0
        %959 = vmatpush1.msra.mxu0 0.0
        %960 = vmatprep.subr.mxu0 0.0
        %961 = vmatpush1.msra.mxu0 0.0
        %962 = vmatprep.subr.mxu0 0.0
        %963 = vmatpush1.msra.mxu0 0.0
        %964 = vmatprep.subr.mxu0 0.0
        %965 = vmatpush1.msra.mxu0 0.0
        %966 = vmatprep.subr.mxu0 0.0
        %967 = vmatpush1.msra.mxu0 0.0
        %968 = vmatprep.subr.mxu0 0.0
        %969 = vmatpush1.msra.mxu0 0.0
        %970 = vmatprep.subr.mxu0 0.0
        %971 = vmatpush1.msra.mxu0 0.0
        %972 = vmatprep.subr.mxu0 0.0
        %973 = vmatpush1.msra.mxu0 0.0
        %974 = vmatprep.subr.mxu0 0.0
        %975 = vmatpush1.msra.mxu0 0.0
        %976 = vmatprep.subr.mxu0 0.0
        %977 = vmatpush1.msra.mxu0 0.0
        %978 = vmatprep.subr.mxu0 0.0
        %979 = vmatpush1.msra.mxu0 0.0
        %980 = vmatprep.subr.mxu0 0.0
        %981 = vmatpush1.msra.mxu0 0.0
        %982 = vmatprep.subr.mxu0 0.0
        %983 = vmatpush1.msra.mxu0 0.0
        %984 = vmatprep.mubr.f32.mxu0 0.0
        %985 = vmatmul.mubr.f32.gmra.mrb[0].mxu0 %v915
        %v986 = vpop.f32.mrb[0].mxu0
        %v987 = vadd.f32 0.0, %v986
        %v988 = vpop.f32.mrb[0].mxu0
        %989 = vmatprep.mubr.f32.mxu0 0.0
        %990 = vmatmul.mubr.f32.gmra.mrb[0].mxu0 %v918
        %v991 = vpop.f32.mrb[0].mxu0
        %v992 = vadd.f32 0.0, %v991
        %v993 = vpop.f32.mrb[0].mxu0
        %994 = vdwg.mxu0
        %997 = vrot.lane.b32.xlu0 %v825, 16
        %v998 = vpop.permute.xlu0 %997
        %999 = vrot.lane.b32.xlu0 %v830, 16
        %v1000 = vpop.permute.xlu0 %999
        %1005 = vrot.lane.b32.xlu0 %v906, 32
        %v1006 = vpop.permute.xlu0 %1005
        %1007 = vrot.lane.b32.xlu0 %v911, 32
        %v1008 = vpop.permute.xlu0 %1007
        %1013 = vrot.lane.b32.xlu0 %v987, 48
        %v1014 = vpop.permute.xlu0 %1013
        %1015 = vrot.lane.b32.xlu0 %v992, 48
        %v1016 = vpop.permute.xlu0 %1015
        %v1019 = vsel %vm564, %v744, %v998
        %v1020 = vsel %vm564, %v749, %v1000
        %vm1021 = vcmask 261120
        %v1022 = vsel %vm1021, %v1019, %v1006
        %v1023 = vsel %vm1021, %v1020, %v1008
        %vm1024 = vcmask 392192
        %v1025 = vsel %vm1024, %v1022, %v1014
        %v1026 = vsel %vm1024, %v1023, %v1016
        %v1028 = vlaneseq
        %v1029 = vshrl.u32 %v1028, 7
        %v1030 = vsub.s32 0, %v1029
        %v1031 = vrot.slane %v262, %v1030
        %v1033 = vadd.f32 %v1025, %v1031
        %v1034 = vadd.f32 %v1026, %v1031
        %vm1035 = vcmp.gt.f32.partialorder %v1033, 0.0
        %vm1036 = vcmp.gt.f32.partialorder %v1034, 0.0
        %v1037 = vmul.f32 %v1033, 1.442695
        %v1038 = vpow.pop %v1037
        %v1039 = vmul.f32 %v1034, 1.442695
        %v1040 = vpow.pop %v1039
        %v1041 = vsub.f32 %v1038, 1.0
        %v1042 = vsub.f32 %v1040, 1.0
        %v1043 = vsel %vm1035, %v1033, %v1041
        %v1044 = vsel %vm1036, %v1034, %v1042
        %vm1045 = vcmask 523264
        %v1047 = vsel %vm1045, %v1043, 0
        %v1050 = vsel %vm1045, %v1044, 0
        %1052 = vmatprep.subr.mxu0 0.0
        %1053 = vmatpush1.msra.mxu0 %v265
        %1054 = vmatprep.subr.mxu0 0.0
        %1055 = vmatpush1.msra.mxu0 %v266
        %1056 = vmatprep.subr.mxu0 0.0
        %1057 = vmatpush1.msra.mxu0 %v267
        %1058 = vmatprep.subr.mxu0 0.0
        %1059 = vmatpush1.msra.mxu0 %v268
        %1060 = vmatprep.subr.mxu0 0.0
        %1061 = vmatpush1.msra.mxu0 %v269
        %1062 = vmatprep.subr.mxu0 0.0
        %1063 = vmatpush1.msra.mxu0 %v270
        %1064 = vmatprep.subr.mxu0 0.0
        %1065 = vmatpush1.msra.mxu0 %v271
        %1066 = vmatprep.subr.mxu0 0.0
        %1067 = vmatpush1.msra.mxu0 %v272
        %1068 = vmatprep.subr.mxu0 0.0
        %1069 = vmatpush1.msra.mxu0 0.0
        %1070 = vmatprep.subr.mxu0 0.0
        %1071 = vmatpush1.msra.mxu0 0.0
        %1072 = vmatprep.subr.mxu0 0.0
        %1073 = vmatpush1.msra.mxu0 0.0
        %1074 = vmatprep.subr.mxu0 0.0
        %1075 = vmatpush1.msra.mxu0 0.0
        %1076 = vmatprep.subr.mxu0 0.0
        %1077 = vmatpush1.msra.mxu0 0.0
        %1078 = vmatprep.subr.mxu0 0.0
        %1079 = vmatpush1.msra.mxu0 0.0
        %1080 = vmatprep.subr.mxu0 0.0
        %1081 = vmatpush1.msra.mxu0 0.0
        %1082 = vmatprep.subr.mxu0 0.0
        %1083 = vmatpush1.msra.mxu0 0.0
        %1084 = vmatprep.subr.mxu0 0.0
        %1085 = vmatpush1.msra.mxu0 0.0
        %1086 = vmatprep.subr.mxu0 0.0
        %1087 = vmatpush1.msra.mxu0 0.0
        %1088 = vmatprep.subr.mxu0 0.0
        %1089 = vmatpush1.msra.mxu0 0.0
        %1090 = vmatprep.subr.mxu0 0.0
        %1091 = vmatpush1.msra.mxu0 0.0
        %1092 = vmatprep.subr.mxu0 0.0
        %1093 = vmatpush1.msra.mxu0 0.0
        %1094 = vmatprep.subr.mxu0 0.0
        %1095 = vmatpush1.msra.mxu0 0.0
        %1096 = vmatprep.subr.mxu0 0.0
        %1097 = vmatpush1.msra.mxu0 0.0
        %1098 = vmatprep.subr.mxu0 0.0
        %1099 = vmatpush1.msra.mxu0 0.0
        %1100 = vmatprep.subr.mxu0 0.0
        %1101 = vmatpush1.msra.mxu0 0.0
        %1102 = vmatprep.subr.mxu0 0.0
        %1103 = vmatpush1.msra.mxu0 0.0
        %1104 = vmatprep.subr.mxu0 0.0
        %1105 = vmatpush1.msra.mxu0 0.0
        %1106 = vmatprep.subr.mxu0 0.0
        %1107 = vmatpush1.msra.mxu0 0.0
        %1108 = vmatprep.subr.mxu0 0.0
        %1109 = vmatpush1.msra.mxu0 0.0
        %1110 = vmatprep.subr.mxu0 0.0
        %1111 = vmatpush1.msra.mxu0 0.0
        %1112 = vmatprep.subr.mxu0 0.0
        %1113 = vmatpush1.msra.mxu0 0.0
        %1114 = vmatprep.subr.mxu0 0.0
        %1115 = vmatpush1.msra.mxu0 0.0
        %1116 = vmatprep.mubr.f32.mxu0 0.0
        %1117 = vmatmul.mubr.f32.gmra.mrb[0].mxu0 %v1047
        %v1118 = vpop.f32.mrb[0].mxu0
        %v1119 = vadd.f32 0.0, %v1118
        %v1120 = vpop.f32.mrb[0].mxu0
        %1121 = vmatprep.mubr.f32.mxu0 0.0
        %1122 = vmatmul.mubr.f32.gmra.mrb[0].mxu0 %v1050
        %v1123 = vpop.f32.mrb[0].mxu0
        %v1124 = vadd.f32 0.0, %v1123
        %v1125 = vpop.f32.mrb[0].mxu0
        %1126 = vdwg.mxu0
        %1129 = vrot.lane.b32.xlu0 %v1119, 96
        %v1130 = vpop.permute.xlu0 %1129
        %1131 = vrot.lane.b32.xlu0 %v1124, 96
        %v1132 = vpop.permute.xlu0 %1131
        %1135 = vxpose.xlu0.b32.start [1/16] %v1130, 128
        %1136 = vxpose.xlu0.b32.cont [2/16] %v1132, 128
        %1137 = vxpose.xlu0.b32.cont [3/16] 0.0, 128
        %1138 = vxpose.xlu0.b32.cont [4/16] 0.0, 128
        %1139 = vxpose.xlu0.b32.cont [5/16] 0.0, 128
        %1140 = vxpose.xlu0.b32.cont [6/16] 0.0, 128
        %1141 = vxpose.xlu0.b32.cont [7/16] 0.0, 128
        %1142 = vxpose.xlu0.b32.cont [8/16] 0.0, 128
        %1143 = vxpose.xlu0.b32.cont [9/16] 0.0, 128
        %1144 = vxpose.xlu0.b32.cont [10/16] 0.0, 128
        %1145 = vxpose.xlu0.b32.cont [11/16] 0.0, 128
        %1146 = vxpose.xlu0.b32.cont [12/16] 0.0, 128
        %1147 = vxpose.xlu0.b32.cont [13/16] 0.0, 128
        %1148 = vxpose.xlu0.b32.cont [14/16] 0.0, 128
        %1149 = vxpose.xlu0.b32.cont [15/16] 0.0, 128
        %1150 = vxpose.xlu0.b32.end [16/16] 0.0, 128
        %v1151 = vpop.trf.xlu0
        %v1152 = vpop.trf.xlu0
        %v1153 = vpop.trf.xlu0
        %v1154 = vpop.trf.xlu0
        %v1155 = vpop.trf.xlu0
        %v1156 = vpop.trf.xlu0
        %v1157 = vpop.trf.xlu0
        %v1158 = vpop.trf.xlu0
        %v1159 = vpop.trf.xlu0
        %v1160 = vpop.trf.xlu0
        %v1161 = vpop.trf.xlu0
        %v1162 = vpop.trf.xlu0
        %v1163 = vpop.trf.xlu0
        %v1164 = vpop.trf.xlu0
        %v1165 = vpop.trf.xlu0
        %v1166 = vpop.trf.xlu0
        %1167 = vset.pattern.permute.xlu0 33
        %1168 = vperm.xlu0 %1167, %v1119
        %v1169 = vpop.permute.xlu0 %1168
        %1171 = vset.pattern.permute.xlu0 33
        %1172 = vperm.xlu0 %1171, %v1124
        %v1173 = vpop.permute.xlu0 %1172
        %v1175 = vlaneseq
        %v1176 = vshrl.u32 %v1175, 7
        %v1177 = vsub.s32 0, %v1176
        %v1178 = vrot.slane %v1151, %v1177
        %v1179 = vadd.f32 %v1169, %v1178
        %v1180 = vadd.f32 %v1173, %v1178
        %vm1181 = vcmp.gt.f32.partialorder %v1179, 0.0
        %vm1182 = vcmp.gt.f32.partialorder %v1180, 0.0
        %v1183 = vmul.f32 %v1179, 0.2
        %v1184 = vmul.f32 %v1180, 0.2
        %v1185 = vsel %vm1181, %v1179, %v1183
        %v1186 = vsel %vm1182, %v1180, %v1184
        %v1187 = vadd.f32 %v1185, %v256
        %v1188 = vadd.f32 %v1186, %v257
        %v1189 = vsel %vm564, %v1187, -inf
        %1190 = vmax.xlane.f32.xlu0 %v1189
        %v1191 = vpop.xlane.xlu0 %1190
        %v1192 = vsel %vm564, %v1188, -inf
        %1193 = vmax.xlane.f32.xlu0 %v1192
        %v1194 = vpop.xlane.xlu0 %1193
        %v1195 = vsub.f32 %v1187, %v1191
        %v1196 = vsub.f32 %v1188, %v1194
        %v1197 = vmul.f32 %v1195, 1.442695
        %v1198 = vpow.pop %v1197
        %v1199 = vmul.f32 %v1196, 1.442695
        %v1200 = vpow.pop %v1199
        %v1201 = vsel %vm564, %v1198, 0.0
        %1202 = vadd.xlane.f32.xlu0 %v1201
        %v1203 = vpop.xlane.xlu0 %1202
        %v1204 = vsel %vm564, %v1200, 0.0
        %1205 = vadd.xlane.f32.xlu0 %v1204
        %v1206 = vpop.xlane.xlu0 %1205
        %v1207 = vrcp.pop %v1203
        %v1208 = vmul.f32 %v1198, %v1207
        %v1209 = vrcp.pop %v1206
        %v1210 = vmul.f32 %v1200, %v1209
        %v1212 = vlaneseq
        %v1213 = vshrl.u32 %v1212, 7
        %v1214 = vsub.s32 0, %v1213
        %v1215 = vrot.slane %v274, %v1214
        %v1218 = vsel %vm564, %v1208, 0
        %v1221 = vsel %vm564, %v1210, 0
        %1223 = vmatprep.subr.mxu0 0.0
        %1224 = vmatpush1.msra.mxu0 %v1119
        %1225 = vmatprep.subr.mxu0 0.0
        %1226 = vmatpush1.msra.mxu0 %v1124
        %1227 = vmatprep.subr.mxu0 0.0
        %1228 = vmatpush1.msra.mxu0 0.0
        %1229 = vmatprep.subr.mxu0 0.0
        %1230 = vmatpush1.msra.mxu0 0.0
        %1231 = vmatprep.subr.mxu0 0.0
        %1232 = vmatpush1.msra.mxu0 0.0
        %1233 = vmatprep.subr.mxu0 0.0
        %1234 = vmatpush1.msra.mxu0 0.0
        %1235 = vmatprep.subr.mxu0 0.0
        %1236 = vmatpush1.msra.mxu0 0.0
        %1237 = vmatprep.subr.mxu0 0.0
        %1238 = vmatpush1.msra.mxu0 0.0
        %1239 = vmatprep.subr.mxu0 0.0
        %1240 = vmatpush1.msra.mxu0 0.0
        %1241 = vmatprep.subr.mxu0 0.0
        %1242 = vmatpush1.msra.mxu0 0.0
        %1243 = vmatprep.subr.mxu0 0.0
        %1244 = vmatpush1.msra.mxu0 0.0
        %1245 = vmatprep.subr.mxu0 0.0
        %1246 = vmatpush1.msra.mxu0 0.0
        %1247 = vmatprep.subr.mxu0 0.0
        %1248 = vmatpush1.msra.mxu0 0.0
        %1249 = vmatprep.subr.mxu0 0.0
        %1250 = vmatpush1.msra.mxu0 0.0
        %1251 = vmatprep.subr.mxu0 0.0
        %1252 = vmatpush1.msra.mxu0 0.0
        %1253 = vmatprep.subr.mxu0 0.0
        %1254 = vmatpush1.msra.mxu0 0.0
        %1255 = vmatprep.subr.mxu0 0.0
        %1256 = vmatpush1.msra.mxu0 0.0
        %1257 = vmatprep.subr.mxu0 0.0
        %1258 = vmatpush1.msra.mxu0 0.0
        %1259 = vmatprep.subr.mxu0 0.0
        %1260 = vmatpush1.msra.mxu0 0.0
        %1261 = vmatprep.subr.mxu0 0.0
        %1262 = vmatpush1.msra.mxu0 0.0
        %1263 = vmatprep.subr.mxu0 0.0
        %1264 = vmatpush1.msra.mxu0 0.0
        %1265 = vmatprep.subr.mxu0 0.0
        %1266 = vmatpush1.msra.mxu0 0.0
        %1267 = vmatprep.subr.mxu0 0.0
        %1268 = vmatpush1.msra.mxu0 0.0
        %1269 = vmatprep.subr.mxu0 0.0
        %1270 = vmatpush1.msra.mxu0 0.0
        %1271 = vmatprep.subr.mxu0 0.0
        %1272 = vmatpush1.msra.mxu0 0.0
        %1273 = vmatprep.subr.mxu0 0.0
        %1274 = vmatpush1.msra.mxu0 0.0
        %1275 = vmatprep.subr.mxu0 0.0
        %1276 = vmatpush1.msra.mxu0 0.0
        %1277 = vmatprep.subr.mxu0 0.0
        %1278 = vmatpush1.msra.mxu0 0.0
        %1279 = vmatprep.subr.mxu0 0.0
        %1280 = vmatpush1.msra.mxu0 0.0
        %1281 = vmatprep.subr.mxu0 0.0
        %1282 = vmatpush1.msra.mxu0 0.0
        %1283 = vmatprep.subr.mxu0 0.0
        %1284 = vmatpush1.msra.mxu0 0.0
        %1285 = vmatprep.subr.mxu0 0.0
        %1286 = vmatpush1.msra.mxu0 0.0
        %1287 = vmatprep.mubr.f32.mxu0 0.0
        %1288 = vmatmul.mubr.f32.gmra.mrb[0].mxu0 %v1218
        %v1289 = vpop.f32.mrb[0].mxu0
        %v1290 = vadd.f32 %v1215, %v1289
        %v1291 = vpop.f32.mrb[0].mxu0
        %1292 = vmatprep.mubr.f32.mxu0 0.0
        %1293 = vmatmul.mubr.f32.gmra.mrb[0].mxu0 %v1221
        %v1294 = vpop.f32.mrb[0].mxu0
        %v1295 = vadd.f32 %v1215, %v1294
        %v1296 = vpop.f32.mrb[0].mxu0
        %1297 = vdwg.mxu0
        %v1298 = vsel %vm1021, %v1290, -inf
        %1299 = vmax.xlane.f32.xlu0 %v1298
        %v1300 = vpop.xlane.xlu0 %1299
        %v1301 = vsel %vm1021, %v1295, -inf
        %1302 = vmax.xlane.f32.xlu0 %v1301
        %v1303 = vpop.xlane.xlu0 %1302
        %v1304 = vsub.f32 %v1290, %v1300
        %v1305 = vsub.f32 %v1295, %v1303
        %v1306 = vmul.f32 %v1304, 1.442695
        %v1307 = vpow.pop %v1306
        %v1308 = vmul.f32 %v1305, 1.442695
        %v1309 = vpow.pop %v1308
        %v1310 = vsel %vm1021, %v1307, 0.0
        %1311 = vadd.xlane.f32.xlu0 %v1310
        %v1312 = vpop.xlane.xlu0 %1311
        %v1313 = vsel %vm1021, %v1309, 0.0
        %1314 = vadd.xlane.f32.xlu0 %v1313
        %v1315 = vpop.xlane.xlu0 %1314
        %v1316 = vlog2.pop %v1312
        %v1317 = vmul.f32 %v1316, 0.6931472
        %v1318 = vlog2.pop %v1315
        %v1319 = vmul.f32 %v1318, 0.6931472
        %v1320 = vsub.f32 %v1304, %v1317
        %v1321 = vsub.f32 %v1305, %v1319
        %1322 = vst.msk [vmem:[%s244] sm:$0xff] %vm1021, %v1320
        %1323 = vst.msk [vmem:[%s244 + $0x8] sm:$0xff] %vm1021, %v1321
        %s1324 = sand.u32 %s159, 1
        %s1325 = scalar_lea.sflag [#allocation3], %s1324
        %s1326 = sand.u32 %s159, 1
        %s1327 = smul.addr %s1326, 16
        %s1328 = scalar_lea.vmem [#allocation2], %s1327
        // Predicated region
        $region45: #{tpu_custom_call.1} parent=43 // pred_check
          %p1329 = pneg %p169
        $region46: #{tpu_custom_call.1} parent=43 // pred_check_branch
          %1331 = sbr.rel (%p1329) target = $region48
        $region47: #{tpu_custom_call.1} parent=43 // pred_region
          %s1333 = ssub.s32 256, 256
          %1334 = vsyncadd %s1325, %s1333
          %s1335 = smul.addr %s20, 2
          %s1336 = smul.addr %s1335, 128
          %s1337 = scalar_lea.hbm %s6, %s1336
          %s1338 = sshll.u32 %s1328, 4
          %s1339 = int_to_ptr.vmem [resolvable:$true] %s1338
          %1344 = dma.vmem_to_hbm [thread:$0]  %s1339, 256, %s1337, %s1325, 128, 128, 8
        $region48: #{tpu_custom_call.1} parent=43 // pred_fallthru
          _
      $region44: #{tpu_custom_call.1} parent=5 // pred_fallthru
        _
      %p1345 = scmp.le.s32.totalorder 2, %s15
      // Predicated region
      $region49: #{tpu_custom_call.1} parent=5 // pred_check
        %p1346 = pneg %p1345
      $region50: #{tpu_custom_call.1} parent=5 // pred_check_branch
        %1348 = sbr.rel (%p1346) target = $region52
      $region51: #{tpu_custom_call.1} parent=5 // pred_region
        %s1349 = ssub.s32 %s15, 2
        // Predicated region
        $region53: #{tpu_custom_call.1} parent=51 // pred_check
          %p1350 = pneg %p175
        $region54: #{tpu_custom_call.1} parent=51 // pred_check_branch
          %1352 = sbr.rel (%p1350) target = $region56
        $region55: #{tpu_custom_call.1} parent=51 // pred_region
          %s1353 = sand.u32 %s160, 1
          %s1354 = scalar_lea.sflag [#allocation3], %s1353
          %s1355 = sand.u32 %s160, 1
          %s1356 = smul.addr %s1355, 16
          %s1357 = scalar_lea.vmem [#allocation2], %s1356
          %1358 = dma.done %s1354, 256
        $region56: #{tpu_custom_call.1} parent=51 // pred_fallthru
          _
      $region52: #{tpu_custom_call.1} parent=5 // pred_fallthru
        _
    $region6: #{tpu_custom_call.1} parent=1 // loop_footer
      %s19 = sadd.s32 1, %s15
    $region7: #{tpu_custom_call.1} parent=1 // loop_footer_branch
      %14 = sbr.rel target = $region3
    $region8: #{tpu_custom_call.1} parent=1 // loop_exit
      _
    %1359 = vsyncpa [#allocation3], 1
    %s1360 = scalar_lea.sflag [#allocation3], 1
    %1361 = vsyncpa %s1360, 1

</llo_original>
